<compile_context>
chip_gen: v5e
topology: v5e:2x2
jax: 0.10.0
libtpu: 0.0.40
codegen_flags: <defaults>
</compile_context>

<pallas_src>
import functools

import jax
import jax.numpy as jnp
from jax.experimental import pallas as pl
from jax.experimental.pallas import tpu as pltpu


# ----------------------------------------------------------------------------
# Pallas kernel: whole-sequence ULSTM recurrence for one batch block.
# ----------------------------------------------------------------------------
def ulstm_kernel(x_ref, w5_ref, whm_ref, b5_ref, ch_ref, *,
                 seq_len: int, mem: int, use_o: bool):
    b_blk = ch_ref.shape[1]

    # Resident weights: bf16 MXU operands, f32 accumulation.
    w5 = w5_ref[...]                       # (in_dim, 5*mem) bf16, order i,o,z,f,u
    whm = whm_ref[...]                     # (mem, 5*mem)    bf16, [ wh | wm ]
    wh = whm[:, :4 * mem]                  # (mem, 4*mem)
    wm = whm[:, 4 * mem:]                  # (mem, mem)
    b5 = b5_ref[...]                       # (1, 5*mem) f32  (bh, bm pre-folded)

    # Pre-pass: x-projection for every step (independent of the recurrence, so
    # these dots sit off the serial chain and overlap with it).
    gx_steps, ux_steps = [], []
    for t in range(seq_len):
        p = jnp.dot(x_ref[t], w5, preferred_element_type=jnp.float32) + b5
        gx_steps.append(p[:, :4 * mem])    # (B_blk, 4*mem)
        ux_steps.append(p[:, 4 * mem:])    # (B_blk, mem)

    c = jnp.zeros((b_blk, mem), jnp.float32)
    h = jnp.zeros((b_blk, mem), jnp.float32)
    tc = jnp.zeros((b_blk, mem), jnp.float32)   # tanh(c); tanh(0) = 0

    # Fully unrolled recurrence (seq_len is small & static).
    for t in range(seq_len):
        gh = jnp.dot(h.astype(jnp.bfloat16), wh,
                     preferred_element_type=jnp.float32)          # (B_blk, 4*mem)
        # One fused 128-lane sigmoid over all four gates (order i,o,z,f matches
        # between the x- and h-projections).
        gates = jax.nn.sigmoid(gx_steps[t] + gh)
        i = gates[:, 0 * mem:1 * mem]
        z = gates[:, 2 * mem:3 * mem]
        f = gates[:, 3 * mem:4 * mem]

        # candidate: u = tanh(ux + (z * tanh(c_{t-1})) @ wm)   (bm folded in)
        m_in = (z * tc).astype(jnp.bfloat16)
        u = jnp.tanh(ux_steps[t] +
                     jnp.dot(m_in, wm, preferred_element_type=jnp.float32))

        c = i * u + f * c
        tc = jnp.tanh(c)                   # reused for h and next step's m_in
        if use_o:
            o = gates[:, 1 * mem:2 * mem]
            h = o * tc
        else:
            h = tc

    ch_ref[0] = c
    ch_ref[1] = h


# ----------------------------------------------------------------------------
# Wrappers: parameter packing (transpose, concat, bias folding) + pallas_call.
# ----------------------------------------------------------------------------
def _pick_batch_block(batch):
    if batch % 8 != 0:
        return batch                        # full-batch block (single grid step)
    for cand in (128, 64, 32, 16, 8):
        if batch % cand == 0:
            return cand
    return batch


def ulstm_forward_batched(xb, params, use_o=True, batch_block=None):
    """xb: (B, seq_len, in_dim) float32. Returns (c_T, h_T), each (B, mem)."""
    B, S, in_dim = xb.shape
    mem = params["wm"].shape[0]             # torch layout: (out, in) = (mem, mem)
    if batch_block is None:
        batch_block = _pick_batch_block(B)
    assert B % batch_block == 0

    # Torch-layout weights are (out_features, in_features); transpose so the
    # kernel computes y = x @ W.  Pack into two bf16 slabs and fold biases.
    wx_t = jnp.asarray(params["wx"], jnp.float32).T          # (in_dim, 5*mem)
    wh_t = jnp.asarray(params["wh"], jnp.float32).T          # (mem, 4*mem)
    wm_t = jnp.asarray(params["wm"], jnp.float32).T          # (mem, mem)
    w5 = wx_t.astype(jnp.bfloat16)                           # (in_dim, 5*mem)
    whm = jnp.concatenate([wh_t, wm_t], axis=1).astype(jnp.bfloat16)  # (mem, 5*mem)

    bx = jnp.asarray(params["bx"], jnp.float32)
    bh = jnp.asarray(params["bh"], jnp.float32)
    bm = jnp.asarray(params["bm"], jnp.float32)
    b5 = jnp.concatenate([bx[:4 * mem] + bh, bx[4 * mem:] + bm])[None, :]  # (1,5*mem)

    # Time-major so each step's batch rows are one contiguous sublane slab.
    x_tm = jnp.transpose(xb, (1, 0, 2)).astype(jnp.bfloat16)  # (S, B, in_dim)

    kernel = functools.partial(ulstm_kernel, seq_len=S, mem=mem, use_o=use_o)

    ch = pl.pallas_call(
        kernel,
        out_shape=jax.ShapeDtypeStruct((2, B, mem), jnp.float32),
        grid=(B // batch_block,),
        in_specs=[
            pl.BlockSpec((S, batch_block, in_dim), lambda b: (0, b, 0)),
            pl.BlockSpec((in_dim, 5 * mem), lambda b: (0, 0)),   # resident weights
            pl.BlockSpec((mem, 5 * mem), lambda b: (0, 0)),
            pl.BlockSpec((1, 5 * mem), lambda b: (0, 0)),
        ],
        out_specs=pl.BlockSpec((2, batch_block, mem), lambda b: (0, b, 0)),
        compiler_params=pltpu.CompilerParams(
            dimension_semantics=("parallel",)),
    )(x_tm, w5, whm, b5)
    return ch[0], ch[1]


def ulstm_forward(x, params, use_o=True):
    """Single-sequence forward matching the PyTorch module.

    x: (seq_len, in_dim). Returns (c_T, h_T), each (1, mem_dim)."""
    return ulstm_forward_batched(x[None], params, use_o=use_o, batch_block=1)


# ----------------------------------------------------------------------------
# Pure-JAX reference (mirrors the PyTorch forward, vectorized over batch).
# ----------------------------------------------------------------------------
def ulstm_reference_batched(xb, params, use_o=True):
    mem = params["wm"].shape[0]
    B, S, _ = xb.shape
    c = jnp.zeros((B, mem), jnp.float32)
    h = jnp.zeros((B, mem), jnp.float32)
    for t in range(S):
        x_t = xb[:, t, :]
        iozfux = x_t @ params["wx"].T + params["bx"]
        ix, ox, zx, fx, ux = [iozfux[:, k * mem:(k + 1) * mem] for k in range(5)]
        iozfh = h @ params["wh"].T + params["bh"]
        ih, oh, zh, fh = [iozfh[:, k * mem:(k + 1) * mem] for k in range(4)]
        i = jax.nn.sigmoid(ix + ih)
        o = jax.nn.sigmoid(ox + oh)
        f = jax.nn.sigmoid(fx + fh)
        z = jax.nn.sigmoid(zx + zh)
        u = jnp.tanh(ux + (z * jnp.tanh(c)) @ params["wm"].T + params["bm"])
        c = i * u + f * c
        h = o * jnp.tanh(c) if use_o else jnp.tanh(c)
    return c, h


# ----------------------------------------------------------------------------
# Deterministic parameter init (torch.nn.Linear default: U(-k, k), k=1/sqrt(fan_in))
# ----------------------------------------------------------------------------
def init_params(key, in_dim, mem_dim):
    ks = jax.random.split(key, 6)

    def lin(kw, kb, fan_in, fan_out):
        bound = 1.0 / jnp.sqrt(fan_in)
        w = jax.random.uniform(kw, (fan_out, fan_in), jnp.float32, -bound, bound)
        b = jax.random.uniform(kb, (fan_out,), jnp.float32, -bound, bound)
        return w, b

    wx, bx = lin(ks[0], ks[1], in_dim, 5 * mem_dim)    # iozfux
    wh, bh = lin(ks[2], ks[3], mem_dim, 4 * mem_dim)   # iozfh
    wm, bm = lin(ks[4], ks[5], mem_dim, mem_dim)       # um
    return dict(wx=wx, bx=bx, wh=wh, bh=bh, wm=wm, bm=bm)


if __name__ == "__main__":
    in_dim, mem_dim, seq_len, batch = 32, 32, 8, 16   # 4*mem = 128 lane-dense gates

    key = jax.random.PRNGKey(0)
    k_x, k_p = jax.random.split(key)
    xb = jax.random.normal(k_x, (batch, seq_len, in_dim), jnp.float32)
    params = init_params(k_p, in_dim, mem_dim)

    # bf16 MXU operands -> loosened tolerance vs the f32 reference.
    ATOL = 5e-2

    # Batched, use_o=True (batch_block=8 -> grid of 2, exercises weight
    # residency across grid steps and parallel sharding on multi-TC chips).
    c_t, h_t = ulstm_forward_batched(xb, params, use_o=True, batch_block=8)
    jax.block_until_ready((c_t, h_t))
    c_ref, h_ref = ulstm_reference_batched(xb, params, use_o=True)
    assert c_t.shape == (batch, mem_dim) and h_t.shape == (batch, mem_dim)
    assert jnp.allclose(c_t, c_ref, atol=ATOL), float(jnp.max(jnp.abs(c_t - c_ref)))
    assert jnp.allclose(h_t, h_ref, atol=ATOL), float(jnp.max(jnp.abs(h_t - h_ref)))

    # Batched, use_o=False (o gate never sliced/used in the kernel).
    c2, h2 = ulstm_forward_batched(xb, params, use_o=False, batch_block=8)
    jax.block_until_ready((c2, h2))
    c2_ref, h2_ref = ulstm_reference_batched(xb, params, use_o=False)
    assert jnp.allclose(c2, c2_ref, atol=ATOL), float(jnp.max(jnp.abs(c2 - c2_ref)))
    assert jnp.allclose(h2, h2_ref, atol=ATOL), float(jnp.max(jnp.abs(h2 - h2_ref)))

    # Single-sequence path (matches the PyTorch module's forward signature).
    c1, h1 = ulstm_forward(xb[0], params, use_o=True)
    jax.block_until_ready((c1, h1))
    assert c1.shape == (1, mem_dim) and h1.shape == (1, mem_dim)
    assert jnp.allclose(c1[0], c_ref[0], atol=ATOL), float(jnp.max(jnp.abs(c1[0] - c_ref[0])))
    assert jnp.allclose(h1[0], h_ref[0], atol=ATOL), float(jnp.max(jnp.abs(h1[0] - h_ref[0])))

    print("KERNEL_OK")
</pallas_src>

<mosaic_0001>
module attributes {stable_mosaic.version = 11 : i64} {
  func.func @ulstm_kernel(%arg0: i32, %arg1: memref<8x8x32xbf16, #tpu.memory_space<vmem>>, %arg2: memref<32x160xbf16, #tpu.memory_space<vmem>>, %arg3: memref<32x160xbf16, #tpu.memory_space<vmem>>, %arg4: memref<1x160xf32, #tpu.memory_space<vmem>>, %arg5: memref<2x8x32xf32, #tpu.memory_space<vmem>>) attributes {dimension_semantics = [#tpu.dimension_semantics<parallel>], iteration_bounds = array<i64: 2>, scalar_prefetch = 0 : i64, scratch_operands = 0 : i64, tpu.core_type = #tpu.core_type<tc>, window_params = [{transform_indices = @transform_0, window_bounds = array<i64: 8, 8, 32>}, {pipeline_mode = #tpu.pipeline_mode<synchronous>, transform_indices = @transform_1, window_bounds = array<i64: 32, 160>}, {pipeline_mode = #tpu.pipeline_mode<synchronous>, transform_indices = @transform_2, window_bounds = array<i64: 32, 160>}, {pipeline_mode = #tpu.pipeline_mode<synchronous>, transform_indices = @transform_3, window_bounds = array<i64: 1, 160>}, {transform_indices = @transform_4, window_bounds = array<i64: 2, 8, 32>}]} {
    %c0 = arith.constant 0 : index
    %c0_0 = arith.constant 0 : index
    %0 = vector.load %arg2[%c0, %c0_0] : memref<32x160xbf16, #tpu.memory_space<vmem>>, vector<32x160xbf16>
    %c0_1 = arith.constant 0 : index
    %c0_2 = arith.constant 0 : index
    %1 = vector.load %arg3[%c0_1, %c0_2] : memref<32x160xbf16, #tpu.memory_space<vmem>>, vector<32x160xbf16>
    %2 = vector.extract_strided_slice %1 {offsets = [0, 0], sizes = [32, 128], strides = [1, 1]} : vector<32x160xbf16> to vector<32x128xbf16>
    %3 = vector.extract_strided_slice %1 {offsets = [0, 128], sizes = [32, 32], strides = [1, 1]} : vector<32x160xbf16> to vector<32x32xbf16>
    %c0_3 = arith.constant 0 : index
    %c0_4 = arith.constant 0 : index
    %4 = vector.load %arg4[%c0_3, %c0_4] : memref<1x160xf32, #tpu.memory_space<vmem>>, vector<1x160xf32>
    %c0_5 = arith.constant 0 : index
    %c0_6 = arith.constant 0 : index
    %c0_7 = arith.constant 0 : index
    %5 = vector.load %arg1[%c0_5, %c0_6, %c0_7] : memref<8x8x32xbf16, #tpu.memory_space<vmem>>, vector<1x8x32xbf16>
    %6 = vector.shape_cast %5 : vector<1x8x32xbf16> to vector<8x32xbf16>
    %cst = arith.constant dense<0.000000e+00> : vector<8x160xf32>
    %7 = tpu.matmul %6, %0, %cst {dimension_numbers = #tpu.dot_dimension_numbers<[1], [0], [0], [1], [0, 0, 1, 1], [], []>} : vector<8x32xbf16>, vector<32x160xbf16>, vector<8x160xf32> -> vector<8x160xf32>
    %8 = vector.broadcast %4 : vector<1x160xf32> to vector<8x160xf32>
    %9 = arith.addf %7, %8 : vector<8x160xf32>
    %10 = vector.extract_strided_slice %9 {offsets = [0, 0], sizes = [8, 128], strides = [1, 1]} : vector<8x160xf32> to vector<8x128xf32>
    %11 = vector.extract_strided_slice %9 {offsets = [0, 128], sizes = [8, 32], strides = [1, 1]} : vector<8x160xf32> to vector<8x32xf32>
    %c1 = arith.constant 1 : index
    %c0_8 = arith.constant 0 : index
    %c0_9 = arith.constant 0 : index
    %12 = vector.load %arg1[%c1, %c0_8, %c0_9] : memref<8x8x32xbf16, #tpu.memory_space<vmem>>, vector<1x8x32xbf16>
    %13 = vector.shape_cast %12 : vector<1x8x32xbf16> to vector<8x32xbf16>
    %cst_10 = arith.constant dense<0.000000e+00> : vector<8x160xf32>
    %14 = tpu.matmul %13, %0, %cst_10 {dimension_numbers = #tpu.dot_dimension_numbers<[1], [0], [0], [1], [0, 0, 1, 1], [], []>} : vector<8x32xbf16>, vector<32x160xbf16>, vector<8x160xf32> -> vector<8x160xf32>
    %15 = vector.broadcast %4 : vector<1x160xf32> to vector<8x160xf32>
    %16 = arith.addf %14, %15 : vector<8x160xf32>
    %17 = vector.extract_strided_slice %16 {offsets = [0, 0], sizes = [8, 128], strides = [1, 1]} : vector<8x160xf32> to vector<8x128xf32>
    %18 = vector.extract_strided_slice %16 {offsets = [0, 128], sizes = [8, 32], strides = [1, 1]} : vector<8x160xf32> to vector<8x32xf32>
    %c2 = arith.constant 2 : index
    %c0_11 = arith.constant 0 : index
    %c0_12 = arith.constant 0 : index
    %19 = vector.load %arg1[%c2, %c0_11, %c0_12] : memref<8x8x32xbf16, #tpu.memory_space<vmem>>, vector<1x8x32xbf16>
    %20 = vector.shape_cast %19 : vector<1x8x32xbf16> to vector<8x32xbf16>
    %cst_13 = arith.constant dense<0.000000e+00> : vector<8x160xf32>
    %21 = tpu.matmul %20, %0, %cst_13 {dimension_numbers = #tpu.dot_dimension_numbers<[1], [0], [0], [1], [0, 0, 1, 1], [], []>} : vector<8x32xbf16>, vector<32x160xbf16>, vector<8x160xf32> -> vector<8x160xf32>
    %22 = vector.broadcast %4 : vector<1x160xf32> to vector<8x160xf32>
    %23 = arith.addf %21, %22 : vector<8x160xf32>
    %24 = vector.extract_strided_slice %23 {offsets = [0, 0], sizes = [8, 128], strides = [1, 1]} : vector<8x160xf32> to vector<8x128xf32>
    %25 = vector.extract_strided_slice %23 {offsets = [0, 128], sizes = [8, 32], strides = [1, 1]} : vector<8x160xf32> to vector<8x32xf32>
    %c3 = arith.constant 3 : index
    %c0_14 = arith.constant 0 : index
    %c0_15 = arith.constant 0 : index
    %26 = vector.load %arg1[%c3, %c0_14, %c0_15] : memref<8x8x32xbf16, #tpu.memory_space<vmem>>, vector<1x8x32xbf16>
    %27 = vector.shape_cast %26 : vector<1x8x32xbf16> to vector<8x32xbf16>
    %cst_16 = arith.constant dense<0.000000e+00> : vector<8x160xf32>
    %28 = tpu.matmul %27, %0, %cst_16 {dimension_numbers = #tpu.dot_dimension_numbers<[1], [0], [0], [1], [0, 0, 1, 1], [], []>} : vector<8x32xbf16>, vector<32x160xbf16>, vector<8x160xf32> -> vector<8x160xf32>
    %29 = vector.broadcast %4 : vector<1x160xf32> to vector<8x160xf32>
    %30 = arith.addf %28, %29 : vector<8x160xf32>
    %31 = vector.extract_strided_slice %30 {offsets = [0, 0], sizes = [8, 128], strides = [1, 1]} : vector<8x160xf32> to vector<8x128xf32>
    %32 = vector.extract_strided_slice %30 {offsets = [0, 128], sizes = [8, 32], strides = [1, 1]} : vector<8x160xf32> to vector<8x32xf32>
    %c4 = arith.constant 4 : index
    %c0_17 = arith.constant 0 : index
    %c0_18 = arith.constant 0 : index
    %33 = vector.load %arg1[%c4, %c0_17, %c0_18] : memref<8x8x32xbf16, #tpu.memory_space<vmem>>, vector<1x8x32xbf16>
    %34 = vector.shape_cast %33 : vector<1x8x32xbf16> to vector<8x32xbf16>
    %cst_19 = arith.constant dense<0.000000e+00> : vector<8x160xf32>
    %35 = tpu.matmul %34, %0, %cst_19 {dimension_numbers = #tpu.dot_dimension_numbers<[1], [0], [0], [1], [0, 0, 1, 1], [], []>} : vector<8x32xbf16>, vector<32x160xbf16>, vector<8x160xf32> -> vector<8x160xf32>
    %36 = vector.broadcast %4 : vector<1x160xf32> to vector<8x160xf32>
    %37 = arith.addf %35, %36 : vector<8x160xf32>
    %38 = vector.extract_strided_slice %37 {offsets = [0, 0], sizes = [8, 128], strides = [1, 1]} : vector<8x160xf32> to vector<8x128xf32>
    %39 = vector.extract_strided_slice %37 {offsets = [0, 128], sizes = [8, 32], strides = [1, 1]} : vector<8x160xf32> to vector<8x32xf32>
    %c5 = arith.constant 5 : index
    %c0_20 = arith.constant 0 : index
    %c0_21 = arith.constant 0 : index
    %40 = vector.load %arg1[%c5, %c0_20, %c0_21] : memref<8x8x32xbf16, #tpu.memory_space<vmem>>, vector<1x8x32xbf16>
    %41 = vector.shape_cast %40 : vector<1x8x32xbf16> to vector<8x32xbf16>
    %cst_22 = arith.constant dense<0.000000e+00> : vector<8x160xf32>
    %42 = tpu.matmul %41, %0, %cst_22 {dimension_numbers = #tpu.dot_dimension_numbers<[1], [0], [0], [1], [0, 0, 1, 1], [], []>} : vector<8x32xbf16>, vector<32x160xbf16>, vector<8x160xf32> -> vector<8x160xf32>
    %43 = vector.broadcast %4 : vector<1x160xf32> to vector<8x160xf32>
    %44 = arith.addf %42, %43 : vector<8x160xf32>
    %45 = vector.extract_strided_slice %44 {offsets = [0, 0], sizes = [8, 128], strides = [1, 1]} : vector<8x160xf32> to vector<8x128xf32>
    %46 = vector.extract_strided_slice %44 {offsets = [0, 128], sizes = [8, 32], strides = [1, 1]} : vector<8x160xf32> to vector<8x32xf32>
    %c6 = arith.constant 6 : index
    %c0_23 = arith.constant 0 : index
    %c0_24 = arith.constant 0 : index
    %47 = vector.load %arg1[%c6, %c0_23, %c0_24] : memref<8x8x32xbf16, #tpu.memory_space<vmem>>, vector<1x8x32xbf16>
    %48 = vector.shape_cast %47 : vector<1x8x32xbf16> to vector<8x32xbf16>
    %cst_25 = arith.constant dense<0.000000e+00> : vector<8x160xf32>
    %49 = tpu.matmul %48, %0, %cst_25 {dimension_numbers = #tpu.dot_dimension_numbers<[1], [0], [0], [1], [0, 0, 1, 1], [], []>} : vector<8x32xbf16>, vector<32x160xbf16>, vector<8x160xf32> -> vector<8x160xf32>
    %50 = vector.broadcast %4 : vector<1x160xf32> to vector<8x160xf32>
    %51 = arith.addf %49, %50 : vector<8x160xf32>
    %52 = vector.extract_strided_slice %51 {offsets = [0, 0], sizes = [8, 128], strides = [1, 1]} : vector<8x160xf32> to vector<8x128xf32>
    %53 = vector.extract_strided_slice %51 {offsets = [0, 128], sizes = [8, 32], strides = [1, 1]} : vector<8x160xf32> to vector<8x32xf32>
    %c7 = arith.constant 7 : index
    %c0_26 = arith.constant 0 : index
    %c0_27 = arith.constant 0 : index
    %54 = vector.load %arg1[%c7, %c0_26, %c0_27] : memref<8x8x32xbf16, #tpu.memory_space<vmem>>, vector<1x8x32xbf16>
    %55 = vector.shape_cast %54 : vector<1x8x32xbf16> to vector<8x32xbf16>
    %cst_28 = arith.constant dense<0.000000e+00> : vector<8x160xf32>
    %56 = tpu.matmul %55, %0, %cst_28 {dimension_numbers = #tpu.dot_dimension_numbers<[1], [0], [0], [1], [0, 0, 1, 1], [], []>} : vector<8x32xbf16>, vector<32x160xbf16>, vector<8x160xf32> -> vector<8x160xf32>
    %57 = vector.broadcast %4 : vector<1x160xf32> to vector<8x160xf32>
    %58 = arith.addf %56, %57 : vector<8x160xf32>
    %59 = vector.extract_strided_slice %58 {offsets = [0, 0], sizes = [8, 128], strides = [1, 1]} : vector<8x160xf32> to vector<8x128xf32>
    %60 = vector.extract_strided_slice %58 {offsets = [0, 128], sizes = [8, 32], strides = [1, 1]} : vector<8x160xf32> to vector<8x32xf32>
    %cst_29 = arith.constant 0.000000e+00 : f32
    %61 = vector.broadcast %cst_29 : f32 to vector<8x32xf32>
    %cst_30 = arith.constant 0.000000e+00 : f32
    %62 = vector.broadcast %cst_30 : f32 to vector<8x32xf32>
    %cst_31 = arith.constant 0.000000e+00 : f32
    %63 = vector.broadcast %cst_31 : f32 to vector<8x32xf32>
    %64 = arith.truncf %62 : vector<8x32xf32> to vector<8x32xbf16>
    %cst_32 = arith.constant dense<0.000000e+00> : vector<8x128xf32>
    %65 = tpu.matmul %64, %2, %cst_32 {dimension_numbers = #tpu.dot_dimension_numbers<[1], [0], [0], [1], [0, 0, 1, 1], [], []>} : vector<8x32xbf16>, vector<32x128xbf16>, vector<8x128xf32> -> vector<8x128xf32>
    %66 = arith.addf %10, %65 : vector<8x128xf32>
    %67 = arith.negf %66 : vector<8x128xf32>
    %68 = math.exp %67 : vector<8x128xf32>
    %cst_33 = arith.constant 1.000000e+00 : f32
    %69 = vector.broadcast %cst_33 : f32 to vector<8x128xf32>
    %70 = arith.addf %69, %68 : vector<8x128xf32>
    %71 = arith.divf %69, %70 : vector<8x128xf32>
    %72 = vector.extract_strided_slice %71 {offsets = [0, 0], sizes = [8, 32], strides = [1, 1]} : vector<8x128xf32> to vector<8x32xf32>
    %73 = vector.extract_strided_slice %71 {offsets = [0, 64], sizes = [8, 32], strides = [1, 1]} : vector<8x128xf32> to vector<8x32xf32>
    %74 = vector.extract_strided_slice %71 {offsets = [0, 96], sizes = [8, 32], strides = [1, 1]} : vector<8x128xf32> to vector<8x32xf32>
    %75 = arith.mulf %73, %63 : vector<8x32xf32>
    %76 = arith.truncf %75 : vector<8x32xf32> to vector<8x32xbf16>
    %cst_34 = arith.constant dense<0.000000e+00> : vector<8x32xf32>
    %77 = tpu.matmul %76, %3, %cst_34 {dimension_numbers = #tpu.dot_dimension_numbers<[1], [0], [0], [1], [0, 0, 1, 1], [], []>} : vector<8x32xbf16>, vector<32x32xbf16>, vector<8x32xf32> -> vector<8x32xf32>
    %78 = arith.addf %11, %77 : vector<8x32xf32>
    %79 = math.tanh %78 : vector<8x32xf32>
    %80 = arith.mulf %72, %79 : vector<8x32xf32>
    %81 = arith.mulf %74, %61 : vector<8x32xf32>
    %82 = arith.addf %80, %81 : vector<8x32xf32>
    %83 = math.tanh %82 : vector<8x32xf32>
    %84 = vector.extract_strided_slice %71 {offsets = [0, 32], sizes = [8, 32], strides = [1, 1]} : vector<8x128xf32> to vector<8x32xf32>
    %85 = arith.mulf %84, %83 : vector<8x32xf32>
    %86 = arith.truncf %85 : vector<8x32xf32> to vector<8x32xbf16>
    %cst_35 = arith.constant dense<0.000000e+00> : vector<8x128xf32>
    %87 = tpu.matmul %86, %2, %cst_35 {dimension_numbers = #tpu.dot_dimension_numbers<[1], [0], [0], [1], [0, 0, 1, 1], [], []>} : vector<8x32xbf16>, vector<32x128xbf16>, vector<8x128xf32> -> vector<8x128xf32>
    %88 = arith.addf %17, %87 : vector<8x128xf32>
    %89 = arith.negf %88 : vector<8x128xf32>
    %90 = math.exp %89 : vector<8x128xf32>
    %cst_36 = arith.constant 1.000000e+00 : f32
    %91 = vector.broadcast %cst_36 : f32 to vector<8x128xf32>
    %92 = arith.addf %91, %90 : vector<8x128xf32>
    %93 = arith.divf %91, %92 : vector<8x128xf32>
    %94 = vector.extract_strided_slice %93 {offsets = [0, 0], sizes = [8, 32], strides = [1, 1]} : vector<8x128xf32> to vector<8x32xf32>
    %95 = vector.extract_strided_slice %93 {offsets = [0, 64], sizes = [8, 32], strides = [1, 1]} : vector<8x128xf32> to vector<8x32xf32>
    %96 = vector.extract_strided_slice %93 {offsets = [0, 96], sizes = [8, 32], strides = [1, 1]} : vector<8x128xf32> to vector<8x32xf32>
    %97 = arith.mulf %95, %83 : vector<8x32xf32>
    %98 = arith.truncf %97 : vector<8x32xf32> to vector<8x32xbf16>
    %cst_37 = arith.constant dense<0.000000e+00> : vector<8x32xf32>
    %99 = tpu.matmul %98, %3, %cst_37 {dimension_numbers = #tpu.dot_dimension_numbers<[1], [0], [0], [1], [0, 0, 1, 1], [], []>} : vector<8x32xbf16>, vector<32x32xbf16>, vector<8x32xf32> -> vector<8x32xf32>
    %100 = arith.addf %18, %99 : vector<8x32xf32>
    %101 = math.tanh %100 : vector<8x32xf32>
    %102 = arith.mulf %94, %101 : vector<8x32xf32>
    %103 = arith.mulf %96, %82 : vector<8x32xf32>
    %104 = arith.addf %102, %103 : vector<8x32xf32>
    %105 = math.tanh %104 : vector<8x32xf32>
    %106 = vector.extract_strided_slice %93 {offsets = [0, 32], sizes = [8, 32], strides = [1, 1]} : vector<8x128xf32> to vector<8x32xf32>
    %107 = arith.mulf %106, %105 : vector<8x32xf32>
    %108 = arith.truncf %107 : vector<8x32xf32> to vector<8x32xbf16>
    %cst_38 = arith.constant dense<0.000000e+00> : vector<8x128xf32>
    %109 = tpu.matmul %108, %2, %cst_38 {dimension_numbers = #tpu.dot_dimension_numbers<[1], [0], [0], [1], [0, 0, 1, 1], [], []>} : vector<8x32xbf16>, vector<32x128xbf16>, vector<8x128xf32> -> vector<8x128xf32>
    %110 = arith.addf %24, %109 : vector<8x128xf32>
    %111 = arith.negf %110 : vector<8x128xf32>
    %112 = math.exp %111 : vector<8x128xf32>
    %cst_39 = arith.constant 1.000000e+00 : f32
    %113 = vector.broadcast %cst_39 : f32 to vector<8x128xf32>
    %114 = arith.addf %113, %112 : vector<8x128xf32>
    %115 = arith.divf %113, %114 : vector<8x128xf32>
    %116 = vector.extract_strided_slice %115 {offsets = [0, 0], sizes = [8, 32], strides = [1, 1]} : vector<8x128xf32> to vector<8x32xf32>
    %117 = vector.extract_strided_slice %115 {offsets = [0, 64], sizes = [8, 32], strides = [1, 1]} : vector<8x128xf32> to vector<8x32xf32>
    %118 = vector.extract_strided_slice %115 {offsets = [0, 96], sizes = [8, 32], strides = [1, 1]} : vector<8x128xf32> to vector<8x32xf32>
    %119 = arith.mulf %117, %105 : vector<8x32xf32>
    %120 = arith.truncf %119 : vector<8x32xf32> to vector<8x32xbf16>
    %cst_40 = arith.constant dense<0.000000e+00> : vector<8x32xf32>
    %121 = tpu.matmul %120, %3, %cst_40 {dimension_numbers = #tpu.dot_dimension_numbers<[1], [0], [0], [1], [0, 0, 1, 1], [], []>} : vector<8x32xbf16>, vector<32x32xbf16>, vector<8x32xf32> -> vector<8x32xf32>
    %122 = arith.addf %25, %121 : vector<8x32xf32>
    %123 = math.tanh %122 : vector<8x32xf32>
    %124 = arith.mulf %116, %123 : vector<8x32xf32>
    %125 = arith.mulf %118, %104 : vector<8x32xf32>
    %126 = arith.addf %124, %125 : vector<8x32xf32>
    %127 = math.tanh %126 : vector<8x32xf32>
    %128 = vector.extract_strided_slice %115 {offsets = [0, 32], sizes = [8, 32], strides = [1, 1]} : vector<8x128xf32> to vector<8x32xf32>
    %129 = arith.mulf %128, %127 : vector<8x32xf32>
    %130 = arith.truncf %129 : vector<8x32xf32> to vector<8x32xbf16>
    %cst_41 = arith.constant dense<0.000000e+00> : vector<8x128xf32>
    %131 = tpu.matmul %130, %2, %cst_41 {dimension_numbers = #tpu.dot_dimension_numbers<[1], [0], [0], [1], [0, 0, 1, 1], [], []>} : vector<8x32xbf16>, vector<32x128xbf16>, vector<8x128xf32> -> vector<8x128xf32>
    %132 = arith.addf %31, %131 : vector<8x128xf32>
    %133 = arith.negf %132 : vector<8x128xf32>
    %134 = math.exp %133 : vector<8x128xf32>
    %cst_42 = arith.constant 1.000000e+00 : f32
    %135 = vector.broadcast %cst_42 : f32 to vector<8x128xf32>
    %136 = arith.addf %135, %134 : vector<8x128xf32>
    %137 = arith.divf %135, %136 : vector<8x128xf32>
    %138 = vector.extract_strided_slice %137 {offsets = [0, 0], sizes = [8, 32], strides = [1, 1]} : vector<8x128xf32> to vector<8x32xf32>
    %139 = vector.extract_strided_slice %137 {offsets = [0, 64], sizes = [8, 32], strides = [1, 1]} : vector<8x128xf32> to vector<8x32xf32>
    %140 = vector.extract_strided_slice %137 {offsets = [0, 96], sizes = [8, 32], strides = [1, 1]} : vector<8x128xf32> to vector<8x32xf32>
    %141 = arith.mulf %139, %127 : vector<8x32xf32>
    %142 = arith.truncf %141 : vector<8x32xf32> to vector<8x32xbf16>
    %cst_43 = arith.constant dense<0.000000e+00> : vector<8x32xf32>
    %143 = tpu.matmul %142, %3, %cst_43 {dimension_numbers = #tpu.dot_dimension_numbers<[1], [0], [0], [1], [0, 0, 1, 1], [], []>} : vector<8x32xbf16>, vector<32x32xbf16>, vector<8x32xf32> -> vector<8x32xf32>
    %144 = arith.addf %32, %143 : vector<8x32xf32>
    %145 = math.tanh %144 : vector<8x32xf32>
    %146 = arith.mulf %138, %145 : vector<8x32xf32>
    %147 = arith.mulf %140, %126 : vector<8x32xf32>
    %148 = arith.addf %146, %147 : vector<8x32xf32>
    %149 = math.tanh %148 : vector<8x32xf32>
    %150 = vector.extract_strided_slice %137 {offsets = [0, 32], sizes = [8, 32], strides = [1, 1]} : vector<8x128xf32> to vector<8x32xf32>
    %151 = arith.mulf %150, %149 : vector<8x32xf32>
    %152 = arith.truncf %151 : vector<8x32xf32> to vector<8x32xbf16>
    %cst_44 = arith.constant dense<0.000000e+00> : vector<8x128xf32>
    %153 = tpu.matmul %152, %2, %cst_44 {dimension_numbers = #tpu.dot_dimension_numbers<[1], [0], [0], [1], [0, 0, 1, 1], [], []>} : vector<8x32xbf16>, vector<32x128xbf16>, vector<8x128xf32> -> vector<8x128xf32>
    %154 = arith.addf %38, %153 : vector<8x128xf32>
    %155 = arith.negf %154 : vector<8x128xf32>
    %156 = math.exp %155 : vector<8x128xf32>
    %cst_45 = arith.constant 1.000000e+00 : f32
    %157 = vector.broadcast %cst_45 : f32 to vector<8x128xf32>
    %158 = arith.addf %157, %156 : vector<8x128xf32>
    %159 = arith.divf %157, %158 : vector<8x128xf32>
    %160 = vector.extract_strided_slice %159 {offsets = [0, 0], sizes = [8, 32], strides = [1, 1]} : vector<8x128xf32> to vector<8x32xf32>
    %161 = vector.extract_strided_slice %159 {offsets = [0, 64], sizes = [8, 32], strides = [1, 1]} : vector<8x128xf32> to vector<8x32xf32>
    %162 = vector.extract_strided_slice %159 {offsets = [0, 96], sizes = [8, 32], strides = [1, 1]} : vector<8x128xf32> to vector<8x32xf32>
    %163 = arith.mulf %161, %149 : vector<8x32xf32>
    %164 = arith.truncf %163 : vector<8x32xf32> to vector<8x32xbf16>
    %cst_46 = arith.constant dense<0.000000e+00> : vector<8x32xf32>
    %165 = tpu.matmul %164, %3, %cst_46 {dimension_numbers = #tpu.dot_dimension_numbers<[1], [0], [0], [1], [0, 0, 1, 1], [], []>} : vector<8x32xbf16>, vector<32x32xbf16>, vector<8x32xf32> -> vector<8x32xf32>
    %166 = arith.addf %39, %165 : vector<8x32xf32>
    %167 = math.tanh %166 : vector<8x32xf32>
    %168 = arith.mulf %160, %167 : vector<8x32xf32>
    %169 = arith.mulf %162, %148 : vector<8x32xf32>
    %170 = arith.addf %168, %169 : vector<8x32xf32>
    %171 = math.tanh %170 : vector<8x32xf32>
    %172 = vector.extract_strided_slice %159 {offsets = [0, 32], sizes = [8, 32], strides = [1, 1]} : vector<8x128xf32> to vector<8x32xf32>
    %173 = arith.mulf %172, %171 : vector<8x32xf32>
    %174 = arith.truncf %173 : vector<8x32xf32> to vector<8x32xbf16>
    %cst_47 = arith.constant dense<0.000000e+00> : vector<8x128xf32>
    %175 = tpu.matmul %174, %2, %cst_47 {dimension_numbers = #tpu.dot_dimension_numbers<[1], [0], [0], [1], [0, 0, 1, 1], [], []>} : vector<8x32xbf16>, vector<32x128xbf16>, vector<8x128xf32> -> vector<8x128xf32>
    %176 = arith.addf %45, %175 : vector<8x128xf32>
    %177 = arith.negf %176 : vector<8x128xf32>
    %178 = math.exp %177 : vector<8x128xf32>
    %cst_48 = arith.constant 1.000000e+00 : f32
    %179 = vector.broadcast %cst_48 : f32 to vector<8x128xf32>
    %180 = arith.addf %179, %178 : vector<8x128xf32>
    %181 = arith.divf %179, %180 : vector<8x128xf32>
    %182 = vector.extract_strided_slice %181 {offsets = [0, 0], sizes = [8, 32], strides = [1, 1]} : vector<8x128xf32> to vector<8x32xf32>
    %183 = vector.extract_strided_slice %181 {offsets = [0, 64], sizes = [8, 32], strides = [1, 1]} : vector<8x128xf32> to vector<8x32xf32>
    %184 = vector.extract_strided_slice %181 {offsets = [0, 96], sizes = [8, 32], strides = [1, 1]} : vector<8x128xf32> to vector<8x32xf32>
    %185 = arith.mulf %183, %171 : vector<8x32xf32>
    %186 = arith.truncf %185 : vector<8x32xf32> to vector<8x32xbf16>
    %cst_49 = arith.constant dense<0.000000e+00> : vector<8x32xf32>
    %187 = tpu.matmul %186, %3, %cst_49 {dimension_numbers = #tpu.dot_dimension_numbers<[1], [0], [0], [1], [0, 0, 1, 1], [], []>} : vector<8x32xbf16>, vector<32x32xbf16>, vector<8x32xf32> -> vector<8x32xf32>
    %188 = arith.addf %46, %187 : vector<8x32xf32>
    %189 = math.tanh %188 : vector<8x32xf32>
    %190 = arith.mulf %182, %189 : vector<8x32xf32>
    %191 = arith.mulf %184, %170 : vector<8x32xf32>
    %192 = arith.addf %190, %191 : vector<8x32xf32>
    %193 = math.tanh %192 : vector<8x32xf32>
    %194 = vector.extract_strided_slice %181 {offsets = [0, 32], sizes = [8, 32], strides = [1, 1]} : vector<8x128xf32> to vector<8x32xf32>
    %195 = arith.mulf %194, %193 : vector<8x32xf32>
    %196 = arith.truncf %195 : vector<8x32xf32> to vector<8x32xbf16>
    %cst_50 = arith.constant dense<0.000000e+00> : vector<8x128xf32>
    %197 = tpu.matmul %196, %2, %cst_50 {dimension_numbers = #tpu.dot_dimension_numbers<[1], [0], [0], [1], [0, 0, 1, 1], [], []>} : vector<8x32xbf16>, vector<32x128xbf16>, vector<8x128xf32> -> vector<8x128xf32>
    %198 = arith.addf %52, %197 : vector<8x128xf32>
    %199 = arith.negf %198 : vector<8x128xf32>
    %200 = math.exp %199 : vector<8x128xf32>
    %cst_51 = arith.constant 1.000000e+00 : f32
    %201 = vector.broadcast %cst_51 : f32 to vector<8x128xf32>
    %202 = arith.addf %201, %200 : vector<8x128xf32>
    %203 = arith.divf %201, %202 : vector<8x128xf32>
    %204 = vector.extract_strided_slice %203 {offsets = [0, 0], sizes = [8, 32], strides = [1, 1]} : vector<8x128xf32> to vector<8x32xf32>
    %205 = vector.extract_strided_slice %203 {offsets = [0, 64], sizes = [8, 32], strides = [1, 1]} : vector<8x128xf32> to vector<8x32xf32>
    %206 = vector.extract_strided_slice %203 {offsets = [0, 96], sizes = [8, 32], strides = [1, 1]} : vector<8x128xf32> to vector<8x32xf32>
    %207 = arith.mulf %205, %193 : vector<8x32xf32>
    %208 = arith.truncf %207 : vector<8x32xf32> to vector<8x32xbf16>
    %cst_52 = arith.constant dense<0.000000e+00> : vector<8x32xf32>
    %209 = tpu.matmul %208, %3, %cst_52 {dimension_numbers = #tpu.dot_dimension_numbers<[1], [0], [0], [1], [0, 0, 1, 1], [], []>} : vector<8x32xbf16>, vector<32x32xbf16>, vector<8x32xf32> -> vector<8x32xf32>
    %210 = arith.addf %53, %209 : vector<8x32xf32>
    %211 = math.tanh %210 : vector<8x32xf32>
    %212 = arith.mulf %204, %211 : vector<8x32xf32>
    %213 = arith.mulf %206, %192 : vector<8x32xf32>
    %214 = arith.addf %212, %213 : vector<8x32xf32>
    %215 = math.tanh %214 : vector<8x32xf32>
    %216 = vector.extract_strided_slice %203 {offsets = [0, 32], sizes = [8, 32], strides = [1, 1]} : vector<8x128xf32> to vector<8x32xf32>
    %217 = arith.mulf %216, %215 : vector<8x32xf32>
    %218 = arith.truncf %217 : vector<8x32xf32> to vector<8x32xbf16>
    %cst_53 = arith.constant dense<0.000000e+00> : vector<8x128xf32>
    %219 = tpu.matmul %218, %2, %cst_53 {dimension_numbers = #tpu.dot_dimension_numbers<[1], [0], [0], [1], [0, 0, 1, 1], [], []>} : vector<8x32xbf16>, vector<32x128xbf16>, vector<8x128xf32> -> vector<8x128xf32>
    %220 = arith.addf %59, %219 : vector<8x128xf32>
    %221 = arith.negf %220 : vector<8x128xf32>
    %222 = math.exp %221 : vector<8x128xf32>
    %cst_54 = arith.constant 1.000000e+00 : f32
    %223 = vector.broadcast %cst_54 : f32 to vector<8x128xf32>
    %224 = arith.addf %223, %222 : vector<8x128xf32>
    %225 = arith.divf %223, %224 : vector<8x128xf32>
    %226 = vector.extract_strided_slice %225 {offsets = [0, 0], sizes = [8, 32], strides = [1, 1]} : vector<8x128xf32> to vector<8x32xf32>
    %227 = vector.extract_strided_slice %225 {offsets = [0, 64], sizes = [8, 32], strides = [1, 1]} : vector<8x128xf32> to vector<8x32xf32>
    %228 = vector.extract_strided_slice %225 {offsets = [0, 96], sizes = [8, 32], strides = [1, 1]} : vector<8x128xf32> to vector<8x32xf32>
    %229 = arith.mulf %227, %215 : vector<8x32xf32>
    %230 = arith.truncf %229 : vector<8x32xf32> to vector<8x32xbf16>
    %cst_55 = arith.constant dense<0.000000e+00> : vector<8x32xf32>
    %231 = tpu.matmul %230, %3, %cst_55 {dimension_numbers = #tpu.dot_dimension_numbers<[1], [0], [0], [1], [0, 0, 1, 1], [], []>} : vector<8x32xbf16>, vector<32x32xbf16>, vector<8x32xf32> -> vector<8x32xf32>
    %232 = arith.addf %60, %231 : vector<8x32xf32>
    %233 = math.tanh %232 : vector<8x32xf32>
    %234 = arith.mulf %226, %233 : vector<8x32xf32>
    %235 = arith.mulf %228, %214 : vector<8x32xf32>
    %236 = arith.addf %234, %235 : vector<8x32xf32>
    %237 = math.tanh %236 : vector<8x32xf32>
    %238 = vector.extract_strided_slice %225 {offsets = [0, 32], sizes = [8, 32], strides = [1, 1]} : vector<8x128xf32> to vector<8x32xf32>
    %239 = arith.mulf %238, %237 : vector<8x32xf32>
    %c0_56 = arith.constant 0 : index
    %c0_57 = arith.constant 0 : index
    %c0_58 = arith.constant 0 : index
    %240 = vector.load %arg5[%c0_56, %c0_57, %c0_58] : memref<2x8x32xf32, #tpu.memory_space<vmem>>, vector<1x8x32xf32>
    %241 = vector.shape_cast %240 : vector<1x8x32xf32> to vector<8x32xf32>
    %242 = vector.shape_cast %236 : vector<8x32xf32> to vector<1x8x32xf32>
    tpu.vector_store %arg5[%c0_56, %c0_57, %c0_58], %242 {strides = array<i32>} : memref<2x8x32xf32, #tpu.memory_space<vmem>>, vector<1x8x32xf32>,
    %c1_59 = arith.constant 1 : index
    %c0_60 = arith.constant 0 : index
    %c0_61 = arith.constant 0 : index
    %243 = vector.load %arg5[%c1_59, %c0_60, %c0_61] : memref<2x8x32xf32, #tpu.memory_space<vmem>>, vector<1x8x32xf32>
    %244 = vector.shape_cast %243 : vector<1x8x32xf32> to vector<8x32xf32>
    %245 = vector.shape_cast %239 : vector<8x32xf32> to vector<1x8x32xf32>
    tpu.vector_store %arg5[%c1_59, %c0_60, %c0_61], %245 {strides = array<i32>} : memref<2x8x32xf32, #tpu.memory_space<vmem>>, vector<1x8x32xf32>,
    return
  }
  func.func @transform_0(%arg0: i32) -> (i32, i32, i32) {
    %c0_i32 = arith.constant 0 : i32
    %c0_i32_0 = arith.constant 0 : i32
    %c0_i32_1 = arith.constant 0 : i32
    return %c0_i32, %arg0, %c0_i32_0 : i32, i32, i32
  }
  func.func @transform_1(%arg0: i32) -> (i32, i32) {
    %c0_i32 = arith.constant 0 : i32
    %c0_i32_0 = arith.constant 0 : i32
    %c0_i32_1 = arith.constant 0 : i32
    return %c0_i32, %c0_i32_0 : i32, i32
  }
  func.func @transform_2(%arg0: i32) -> (i32, i32) {
    %c0_i32 = arith.constant 0 : i32
    %c0_i32_0 = arith.constant 0 : i32
    %c0_i32_1 = arith.constant 0 : i32
    return %c0_i32, %c0_i32_0 : i32, i32
  }
  func.func @transform_3(%arg0: i32) -> (i32, i32) {
    %c0_i32 = arith.constant 0 : i32
    %c0_i32_0 = arith.constant 0 : i32
    %c0_i32_1 = arith.constant 0 : i32
    return %c0_i32, %c0_i32_0 : i32, i32
  }
  func.func @transform_4(%arg0: i32) -> (i32, i32, i32) {
    %c0_i32 = arith.constant 0 : i32
    %c0_i32_0 = arith.constant 0 : i32
    %c0_i32_1 = arith.constant 0 : i32
    return %c0_i32, %arg0, %c0_i32_0 : i32, i32, i32
  }
}

</mosaic_0001>

<llo_original>
// kernel: tpu_custom_call.1
$region0: #{tpu_custom_call.1}
  #allocation0 [shape = 'u32[]', space=smem, size = 0x4, offset = 0x4, fixed_abs, tag = 'smem constant byte address 0x4 - core index']
  #allocation1 [shape = 'u32[72,128]{1,0:T(1,128)}', space=vmem, size = 0x9000, scoped, tag = 'internal scratch']
  %s0 = inlined_call_operand.hbm [shape: bf16[8,16,32], index: 0, kind: input, shape index: {}]
  %s1 = inlined_call_operand.hbm [shape: bf16[32,160], index: 1, kind: input, shape index: {}]
  %s2 = inlined_call_operand.hbm [shape: bf16[32,160], index: 2, kind: input, shape index: {}]
  %s3 = inlined_call_operand.vmem [shape: f32[1,160], index: 3, kind: input, shape index: {}]
  %s4 = inlined_call_operand.hbm [shape: f32[2,16,32], index: 4, kind: output, shape index: {}]
  %s5 = sld [smem:[#allocation0]]
  $region61: #{tpu_custom_call.1} parent=0
    _
  %s7 = ssub.s32 1, %s5
  %s8 = scalar_select 0, %s7, %s5
  $region1: #{tpu_custom_call.1} parent=0
    #allocation2 [shape = 'u8[32768]{0}', space=vmem, size = 0x8000, scoped, tag = 'input window, operand 0']
    #allocation3 [shape = 's32[2]{0}', space=sflag, size = 0x8, scoped, tag = 'scoped memory for tpu_custom_call.1']
    #allocation4 [shape = 's32[2]{0}', space=sflag, size = 0x8, scoped, tag = 'scoped memory for tpu_custom_call.1']
    #allocation5 [shape = 'u8[16384]{0}', space=vmem, size = 0x4000, scoped, tag = 'input window, operand 1, single buffered']
    #allocation6 [shape = 's32[1]{0}', space=sflag, size = 0x4, scoped, tag = 'scoped memory for tpu_custom_call.1']
    #allocation7 [shape = 'u8[16384]{0}', space=vmem, size = 0x4000, scoped, tag = 'input window, operand 2, single buffered']
    #allocation8 [shape = 'u8[16384]{0}', space=vmem, size = 0x4000, scoped, tag = 'output window, operand 0']
    %9 = vsyncpa [#allocation3], 0
    %s10 = scalar_lea.sflag [#allocation3], 1
    %11 = vsyncpa %s10, 0
    %12 = vsyncpa [#allocation6], 0
    %13 = vsyncpa [#allocation4], 0
    %s14 = scalar_lea.sflag [#allocation4], 1
    %15 = vsyncpa %s14, 0
    loop: start=0, step=1, limit=4
    $region2: #{tpu_custom_call.1} parent=1 // loop_pre_header
      _
    $region3: #{tpu_custom_call.1} parent=1 // loop_header
      %s17 = sphi 0, %s21
      %p18 = scmp.ge.s32.totalorder %s17, 4
      %s27 = sphi 0, %s29
      %s30 = sphi 0, %s27
      %s31 = sphi 0, %s30
      %s47 = sphi 0, %s31
      %s51 = sphi 0, %s51
      %s53 = sphi 0, %s51
      %s54 = sphi 0, %s53
      %s68 = sphi 0, %s54
      %s72 = sphi 0, %s72
      %s74 = sphi 0, %s72
      %s75 = sphi 0, %s74
      %s89 = sphi 0, %s75
      %s93 = sphi 0, %s93
      %s95 = sphi 0, %s93
      %s96 = sphi 0, %s95
      %s110 = sphi 0, %s96
      %s116 = sphi 0, %s118
      %s119 = sphi 0, %s116
      %s120 = sphi 0, %s119
      %s136 = sphi 0, %s120
    $region4: #{tpu_custom_call.1} parent=1 // loop_header_branch
      %20 = sbr.rel (%p18) target = $region8
    $region5: #{tpu_custom_call.1} parent=1 // loop_body
      %s22 = ssub.s32 %s17, 1
      %s23 = ssub.s32 %s17, 2
      %s24 = sadd.s32 %s17, 1
      %s25 = ssub.s32 %s17, %s24
      %p26 = scmp.eq.s32.totalorder %s25, 0
      %s28 = sadd.s32 %s27, 1
      %s29 = scalar_select %p26, %s27, %s28
      %p32 = pneg %p26
      %p33 = scmp.eq.s32.totalorder %s17, 1
      %p34 = por %p32, %p33
      %p35 = scmp.ne.s32.totalorder %s27, %s30
      %p36 = scmp.eq.s32.totalorder %s17, 0
      %p37 = por %p35, %p36
      %p38 = scmp.ne.s32.totalorder %s27, %s30
      %p39 = scmp.eq.s32.totalorder %s22, 1
      %p40 = por %p38, %p39
      %p41 = scmp.ne.s32.totalorder %s30, %s31
      %p42 = scmp.eq.s32.totalorder %s22, 0
      %p43 = por %p41, %p42
      %p44 = scmp.ne.s32.totalorder %s30, %s31
      %p45 = scmp.eq.s32.totalorder %s23, 1
      %p46 = por %p44, %p45
      %p48 = scmp.ne.s32.totalorder %s31, %s47
      %p49 = scmp.eq.s32.totalorder %s23, 0
      %p50 = por %p48, %p49
      %s52 = sadd.s32 %s51, 1
      %p55 = scmp.eq.s32.totalorder %s17, 1
      %p56 = scmp.ne.s32.totalorder %s51, %s53
      %p57 = scmp.eq.s32.totalorder %s17, 0
      %p58 = por %p56, %p57
      %p59 = scmp.ne.s32.totalorder %s51, %s53
      %p60 = scmp.eq.s32.totalorder %s22, 1
      %p61 = por %p59, %p60
      %p62 = scmp.ne.s32.totalorder %s53, %s54
      %p63 = scmp.eq.s32.totalorder %s22, 0
      %p64 = por %p62, %p63
      %p65 = scmp.ne.s32.totalorder %s53, %s54
      %p66 = scmp.eq.s32.totalorder %s23, 1
      %p67 = por %p65, %p66
      %p69 = scmp.ne.s32.totalorder %s54, %s68
      %p70 = scmp.eq.s32.totalorder %s23, 0
      %p71 = por %p69, %p70
      %s73 = sadd.s32 %s72, 1
      %p76 = scmp.eq.s32.totalorder %s17, 1
      %p77 = scmp.ne.s32.totalorder %s72, %s74
      %p78 = scmp.eq.s32.totalorder %s17, 0
      %p79 = por %p77, %p78
      %p80 = scmp.ne.s32.totalorder %s72, %s74
      %p81 = scmp.eq.s32.totalorder %s22, 1
      %p82 = por %p80, %p81
      %p83 = scmp.ne.s32.totalorder %s74, %s75
      %p84 = scmp.eq.s32.totalorder %s22, 0
      %p85 = por %p83, %p84
      %p86 = scmp.ne.s32.totalorder %s74, %s75
      %p87 = scmp.eq.s32.totalorder %s23, 1
      %p88 = por %p86, %p87
      %p90 = scmp.ne.s32.totalorder %s75, %s89
      %p91 = scmp.eq.s32.totalorder %s23, 0
      %p92 = por %p90, %p91
      %s94 = sadd.s32 %s93, 1
      %p97 = scmp.eq.s32.totalorder %s17, 1
      %p98 = scmp.ne.s32.totalorder %s93, %s95
      %p99 = scmp.eq.s32.totalorder %s17, 0
      %p100 = por %p98, %p99
      %p101 = scmp.ne.s32.totalorder %s93, %s95
      %p102 = scmp.eq.s32.totalorder %s22, 1
      %p103 = por %p101, %p102
      %p104 = scmp.ne.s32.totalorder %s95, %s96
      %p105 = scmp.eq.s32.totalorder %s22, 0
      %p106 = por %p104, %p105
      %p107 = scmp.ne.s32.totalorder %s95, %s96
      %p108 = scmp.eq.s32.totalorder %s23, 1
      %p109 = por %p107, %p108
      %p111 = scmp.ne.s32.totalorder %s96, %s110
      %p112 = scmp.eq.s32.totalorder %s23, 0
      %p113 = por %p111, %p112
      %s114 = ssub.s32 %s17, %s24
      %p115 = scmp.eq.s32.totalorder %s114, 0
      %s117 = sadd.s32 %s116, 1
      %s118 = scalar_select %p115, %s116, %s117
      %p121 = pneg %p115
      %p122 = scmp.eq.s32.totalorder %s17, 1
      %p123 = por %p121, %p122
      %p124 = scmp.ne.s32.totalorder %s116, %s119
      %p125 = scmp.eq.s32.totalorder %s17, 0
      %p126 = por %p124, %p125
      %p127 = scmp.ne.s32.totalorder %s116, %s119
      %p128 = scmp.eq.s32.totalorder %s22, 1
      %p129 = por %p127, %p128
      %p130 = scmp.ne.s32.totalorder %s119, %s120
      %p131 = scmp.eq.s32.totalorder %s22, 0
      %p132 = por %p130, %p131
      %p133 = scmp.ne.s32.totalorder %s119, %s120
      %p134 = scmp.eq.s32.totalorder %s23, 1
      %p135 = por %p133, %p134
      %p137 = scmp.ne.s32.totalorder %s120, %s136
      %p138 = scmp.eq.s32.totalorder %s23, 0
      %p139 = por %p137, %p138
      %p140 = scmp.le.s32.totalorder 1, %s17
      %p141 = scmp.lt.s32.totalorder %s17, 3
      %p142 = pnand %p140, %p141
      %p143 = pneg %p142
      // Predicated region
      $region9: #{tpu_custom_call.1} parent=5 // pred_check
        _
      $region10: #{tpu_custom_call.1} parent=5 // pred_check_branch
        %145 = sbr.rel (%p142) target = $region12
      $region11: #{tpu_custom_call.1} parent=5 // pred_region
        %s146 = ssub.s32 %s17, 1
        // Predicated region
        $region13: #{tpu_custom_call.1} parent=11 // pred_check
          %p147 = pneg %p64
        $region14: #{tpu_custom_call.1} parent=11 // pred_check_branch
          %149 = sbr.rel (%p147) target = $region16
        $region15: #{tpu_custom_call.1} parent=11 // pred_region
          %151 = vsyncadd [#allocation6], 0
          %s152 = sshll.u32 %s1, 4
          %s153 = int_to_ptr.hbm [resolvable:$true] %s152
          %s154 = sshll.u32 [#allocation5], 4
          %s155 = int_to_ptr.vmem [resolvable:$true] %s154
          %160 = dma.hbm_to_vmem [thread:$0]  %s153, 512, %s155, [#allocation6], 128, 128, 8
        $region16: #{tpu_custom_call.1} parent=11 // pred_fallthru
          _
        // Predicated region
        $region17: #{tpu_custom_call.1} parent=11 // pred_check
          %p161 = pneg %p85
        $region18: #{tpu_custom_call.1} parent=11 // pred_check_branch
          %163 = sbr.rel (%p161) target = $region20
        $region19: #{tpu_custom_call.1} parent=11 // pred_region
          %165 = vsyncadd [#allocation6], 0
          %s166 = sshll.u32 %s2, 4
          %s167 = int_to_ptr.hbm [resolvable:$true] %s166
          %s168 = sshll.u32 [#allocation7], 4
          %s169 = int_to_ptr.vmem [resolvable:$true] %s168
          %174 = dma.hbm_to_vmem [thread:$0]  %s167, 512, %s169, [#allocation6], 128, 128, 8
        $region20: #{tpu_custom_call.1} parent=11 // pred_fallthru
          _
        // Predicated region
        $region21: #{tpu_custom_call.1} parent=11 // pred_check
          %p175 = pneg %p106
        $region22: #{tpu_custom_call.1} parent=11 // pred_check_branch
          %177 = sbr.rel (%p175) target = $region24
        $region23: #{tpu_custom_call.1} parent=11 // pred_region
          _
        $region24: #{tpu_custom_call.1} parent=11 // pred_fallthru
          _
      $region12: #{tpu_custom_call.1} parent=5 // pred_fallthru
        _
      %p178 = scmp.lt.s32.totalorder %s17, 2
      // Predicated region
      $region25: #{tpu_custom_call.1} parent=5 // pred_check
        %p179 = pneg %p178
      $region26: #{tpu_custom_call.1} parent=5 // pred_check_branch
        %181 = sbr.rel (%p179) target = $region28
      $region27: #{tpu_custom_call.1} parent=5 // pred_region
        // Predicated region
        $region29: #{tpu_custom_call.1} parent=27 // pred_check
          %p182 = pneg %p37
        $region30: #{tpu_custom_call.1} parent=27 // pred_check_branch
          %184 = sbr.rel (%p182) target = $region32
        $region31: #{tpu_custom_call.1} parent=27 // pred_region
          %s185 = sand.u32 %s27, 1
          %s186 = scalar_lea.sflag [#allocation3], %s185
          %s187 = sand.u32 %s27, 1
          %s188 = smul.addr %s187, 32
          %s189 = scalar_lea.vmem [#allocation2], %s188
          %191 = vsyncadd %s186, 0
          %s192 = smul.addr %s17, 4
          %s193 = scalar_lea.hbm %s0, %s192
          %s194 = sshll.u32 %s193, 4
          %s195 = int_to_ptr.hbm [resolvable:$true] %s194
          %s196 = sshll.u32 %s189, 4
          %s197 = int_to_ptr.vmem [resolvable:$true] %s196
          %202 = dma.hbm_to_vmem [thread:$0]  %s195, 512, %s197, %s186, 128, 64, 4
        $region32: #{tpu_custom_call.1} parent=27 // pred_fallthru
          _
      $region28: #{tpu_custom_call.1} parent=5 // pred_fallthru
        _
      %p203 = scmp.le.s32.totalorder 1, %s17
      %p204 = scmp.lt.s32.totalorder %s17, 3
      %p205 = pnand %p203, %p204
      %p206 = pneg %p205
      // Predicated region
      $region33: #{tpu_custom_call.1} parent=5 // pred_check
        _
      $region34: #{tpu_custom_call.1} parent=5 // pred_check_branch
        %208 = sbr.rel (%p205) target = $region36
      $region35: #{tpu_custom_call.1} parent=5 // pred_region
        %s209 = ssub.s32 %s17, 1
        %s210 = sand.u32 %s30, 1
        %s211 = scalar_lea.sflag [#allocation3], %s210
        %s212 = sand.u32 %s30, 1
        %s213 = smul.addr %s212, 32
        %s214 = scalar_lea.vmem [#allocation2], %s213
        // Predicated region
        $region37: #{tpu_custom_call.1} parent=35 // pred_check
          %p215 = pneg %p43
        $region38: #{tpu_custom_call.1} parent=35 // pred_check_branch
          %217 = sbr.rel (%p215) target = $region40
        $region39: #{tpu_custom_call.1} parent=35 // pred_region
          %219 = dma.done %s211, 512
        $region40: #{tpu_custom_call.1} parent=35 // pred_fallthru
          _
        // Predicated region
        $region41: #{tpu_custom_call.1} parent=35 // pred_check
          %p220 = pneg %p64
        $region42: #{tpu_custom_call.1} parent=35 // pred_check_branch
          %222 = sbr.rel (%p220) target = $region44
        $region43: #{tpu_custom_call.1} parent=35 // pred_region
          %224 = dma.done [#allocation6], 512
        $region44: #{tpu_custom_call.1} parent=35 // pred_fallthru
          _
        // Predicated region
        $region45: #{tpu_custom_call.1} parent=35 // pred_check
          %p225 = pneg %p85
        $region46: #{tpu_custom_call.1} parent=35 // pred_check_branch
          %227 = sbr.rel (%p225) target = $region48
        $region47: #{tpu_custom_call.1} parent=35 // pred_region
          %229 = dma.done [#allocation6], 512
        $region48: #{tpu_custom_call.1} parent=35 // pred_fallthru
          _
        %s230 = sand.u32 %s30, 1
        %s231 = scalar_lea.sflag [#allocation3], %s230
        %s232 = sand.u32 %s30, 1
        %s233 = smul.addr %s232, 32
        %s234 = scalar_lea.vmem [#allocation2], %s233
        %p235 = pneg %p43
        %p236 = pneg %p40
        %p237 = pneg %p64
        %p238 = pneg %p61
        %p239 = pneg %p85
        %p240 = pneg %p82
        %p241 = pneg %p106
        %p242 = pneg %p103
        %p243 = pneg %p132
        %p244 = pneg %p129
        %s245 = sand.u32 %s119, 1
        %s246 = scalar_lea.sflag [#allocation4], %s245
        %s247 = sand.u32 %s119, 1
        %s248 = smul.addr %s247, 16
        %s249 = scalar_lea.vmem [#allocation8], %s248
        %v251 = vld [vmem:[#allocation5] sm:$0xff]
        %v252 = vld [vmem:[#allocation5 + $0x8] sm:$0xff]
        %v253 = vld [vmem:[#allocation5 + $0x10] sm:$0xff]
        %v254 = vld [vmem:[#allocation5 + $0x18] sm:$0xff]
        %v255 = vld [vmem:[#allocation7] sm:$0xff]
        %v256 = vld [vmem:[#allocation7 + $0x8] sm:$0xff]
        %v257 = vld [vmem:[#allocation7 + $0x10] sm:$0xff]
        %v258 = vld [vmem:[#allocation7 + $0x18] sm:$0xff]
        %v259 = vld [vmem:[%s3] sm:$0x3]
        %v260 = vld [vmem:[%s214] sm:$0xf]
        %v262 = vperm.slane %v259, 0
        %v263 = vperm.slane %v259, 1
        %v270 = vunpack.c.l.b16 %v251
        %v271 = vunpack.c.h.b16 %v251
        %v272 = vunpack.c.l.b16 %v252
        %v273 = vunpack.c.h.b16 %v252
        %v274 = vunpack.c.l.b16 %v253
        %v275 = vunpack.c.h.b16 %v253
        %v276 = vunpack.c.l.b16 %v254
        %v277 = vunpack.c.h.b16 %v254
        %v278 = vpack.c.b16 %v272, %v270
        %v279 = vpack.c.b16 %v273, %v271
        %v280 = vpack.c.b16 %v276, %v274
        %v281 = vpack.c.b16 %v277, %v275
        %vm286 = vcmask 261120
        %v288 = vsel %vm286, %v260, 0
        %290 = vmatpush.bf16.msra.mxu0 0
        %291 = vmatpush.bf16.msra.mxu0 0
        %292 = vmatpush.bf16.msra.mxu0 0
        %293 = vmatpush.bf16.msra.mxu0 0
        %294 = vmatpush.bf16.msra.mxu0 0
        %295 = vmatpush.bf16.msra.mxu0 0
        %296 = vmatpush.bf16.msra.mxu0 %v280
        %297 = vmatpush.bf16.msra.mxu0 %v278
        %298 = vmatmul.bf16.gmra.mxu0 %v288
        %v299 = vpop.f32.mrf.mxu0
        %v300 = vadd.f32 %v262, %v299
        %v301 = vpop.f32.mrf.mxu0
        %302 = vdwg.mxu0
        %303 = vmatpush.bf16.msra.mxu0 0
        %304 = vmatpush.bf16.msra.mxu0 0
        %305 = vmatpush.bf16.msra.mxu0 0
        %306 = vmatpush.bf16.msra.mxu0 0
        %307 = vmatpush.bf16.msra.mxu0 0
        %308 = vmatpush.bf16.msra.mxu0 0
        %309 = vmatpush.bf16.msra.mxu0 %v281
        %310 = vmatpush.bf16.msra.mxu0 %v279
        %311 = vmatmul.bf16.gmra.mxu0 %v288
        %v312 = vpop.f32.mrf.mxu0
        %v313 = vadd.f32 %v263, %v312
        %v314 = vpop.f32.mrf.mxu0
        %315 = vdwg.mxu0
        %s316 = scalar_lea.vmem %s214, 4 [#allocation2]
        %v317 = vld [vmem:[%s316] sm:$0xf]
        %v319 = vsel %vm286, %v317, 0
        %321 = vmatpush.bf16.msra.mxu0 0
        %322 = vmatpush.bf16.msra.mxu0 0
        %323 = vmatpush.bf16.msra.mxu0 0
        %324 = vmatpush.bf16.msra.mxu0 0
        %325 = vmatpush.bf16.msra.mxu0 0
        %326 = vmatpush.bf16.msra.mxu0 0
        %327 = vmatpush.bf16.msra.mxu0 %v280
        %328 = vmatpush.bf16.msra.mxu0 %v278
        %329 = vmatmul.bf16.gmra.mxu0 %v319
        %v330 = vpop.f32.mrf.mxu0
        %v331 = vadd.f32 %v262, %v330
        %v332 = vpop.f32.mrf.mxu0
        %333 = vdwg.mxu0
        %334 = vmatpush.bf16.msra.mxu0 0
        %335 = vmatpush.bf16.msra.mxu0 0
        %336 = vmatpush.bf16.msra.mxu0 0
        %337 = vmatpush.bf16.msra.mxu0 0
        %338 = vmatpush.bf16.msra.mxu0 0
        %339 = vmatpush.bf16.msra.mxu0 0
        %340 = vmatpush.bf16.msra.mxu0 %v281
        %341 = vmatpush.bf16.msra.mxu0 %v279
        %342 = vmatmul.bf16.gmra.mxu0 %v319
        %v343 = vpop.f32.mrf.mxu0
        %v344 = vadd.f32 %v263, %v343
        %v345 = vpop.f32.mrf.mxu0
        %346 = vdwg.mxu0
        %s347 = scalar_lea.vmem %s214, 8 [#allocation2]
        %v348 = vld [vmem:[%s347] sm:$0xf]
        %v350 = vsel %vm286, %v348, 0
        %352 = vmatpush.bf16.msra.mxu0 0
        %353 = vmatpush.bf16.msra.mxu0 0
        %354 = vmatpush.bf16.msra.mxu0 0
        %355 = vmatpush.bf16.msra.mxu0 0
        %356 = vmatpush.bf16.msra.mxu0 0
        %357 = vmatpush.bf16.msra.mxu0 0
        %358 = vmatpush.bf16.msra.mxu0 %v280
        %359 = vmatpush.bf16.msra.mxu0 %v278
        %360 = vmatmul.bf16.gmra.mxu0 %v350
        %v361 = vpop.f32.mrf.mxu0
        %v362 = vadd.f32 %v262, %v361
        %v363 = vpop.f32.mrf.mxu0
        %364 = vdwg.mxu0
        %365 = vmatpush.bf16.msra.mxu0 0
        %366 = vmatpush.bf16.msra.mxu0 0
        %367 = vmatpush.bf16.msra.mxu0 0
        %368 = vmatpush.bf16.msra.mxu0 0
        %369 = vmatpush.bf16.msra.mxu0 0
        %370 = vmatpush.bf16.msra.mxu0 0
        %371 = vmatpush.bf16.msra.mxu0 %v281
        %372 = vmatpush.bf16.msra.mxu0 %v279
        %373 = vmatmul.bf16.gmra.mxu0 %v350
        %v374 = vpop.f32.mrf.mxu0
        %v375 = vadd.f32 %v263, %v374
        %v376 = vpop.f32.mrf.mxu0
        %377 = vdwg.mxu0
        %s378 = scalar_lea.vmem %s214, 12 [#allocation2]
        %v379 = vld [vmem:[%s378] sm:$0xf]
        %v381 = vsel %vm286, %v379, 0
        %383 = vmatpush.bf16.msra.mxu0 0
        %384 = vmatpush.bf16.msra.mxu0 0
        %385 = vmatpush.bf16.msra.mxu0 0
        %386 = vmatpush.bf16.msra.mxu0 0
        %387 = vmatpush.bf16.msra.mxu0 0
        %388 = vmatpush.bf16.msra.mxu0 0
        %389 = vmatpush.bf16.msra.mxu0 %v280
        %390 = vmatpush.bf16.msra.mxu0 %v278
        %391 = vmatmul.bf16.gmra.mxu0 %v381
        %v392 = vpop.f32.mrf.mxu0
        %v393 = vadd.f32 %v262, %v392
        %v394 = vpop.f32.mrf.mxu0
        %395 = vdwg.mxu0
        %396 = vmatpush.bf16.msra.mxu0 0
        %397 = vmatpush.bf16.msra.mxu0 0
        %398 = vmatpush.bf16.msra.mxu0 0
        %399 = vmatpush.bf16.msra.mxu0 0
        %400 = vmatpush.bf16.msra.mxu0 0
        %401 = vmatpush.bf16.msra.mxu0 0
        %402 = vmatpush.bf16.msra.mxu0 %v281
        %403 = vmatpush.bf16.msra.mxu0 %v279
        %404 = vmatmul.bf16.gmra.mxu0 %v381
        %v405 = vpop.f32.mrf.mxu0
        %v406 = vadd.f32 %v263, %v405
        %v407 = vpop.f32.mrf.mxu0
        %408 = vdwg.mxu0
        %s409 = scalar_lea.vmem %s214, 16 [#allocation2]
        %v410 = vld [vmem:[%s409] sm:$0xf]
        %v412 = vsel %vm286, %v410, 0
        %414 = vmatpush.bf16.msra.mxu0 0
        %415 = vmatpush.bf16.msra.mxu0 0
        %416 = vmatpush.bf16.msra.mxu0 0
        %417 = vmatpush.bf16.msra.mxu0 0
        %418 = vmatpush.bf16.msra.mxu0 0
        %419 = vmatpush.bf16.msra.mxu0 0
        %420 = vmatpush.bf16.msra.mxu0 %v280
        %421 = vmatpush.bf16.msra.mxu0 %v278
        %422 = vmatmul.bf16.gmra.mxu0 %v412
        %v423 = vpop.f32.mrf.mxu0
        %v424 = vadd.f32 %v262, %v423
        %v425 = vpop.f32.mrf.mxu0
        %426 = vdwg.mxu0
        %427 = vmatpush.bf16.msra.mxu0 0
        %428 = vmatpush.bf16.msra.mxu0 0
        %429 = vmatpush.bf16.msra.mxu0 0
        %430 = vmatpush.bf16.msra.mxu0 0
        %431 = vmatpush.bf16.msra.mxu0 0
        %432 = vmatpush.bf16.msra.mxu0 0
        %433 = vmatpush.bf16.msra.mxu0 %v281
        %434 = vmatpush.bf16.msra.mxu0 %v279
        %435 = vmatmul.bf16.gmra.mxu0 %v412
        %v436 = vpop.f32.mrf.mxu0
        %v437 = vadd.f32 %v263, %v436
        %v438 = vpop.f32.mrf.mxu0
        %439 = vdwg.mxu0
        %s440 = scalar_lea.vmem %s214, 20 [#allocation2]
        %v441 = vld [vmem:[%s440] sm:$0xf]
        %v443 = vsel %vm286, %v441, 0
        %445 = vmatpush.bf16.msra.mxu0 0
        %446 = vmatpush.bf16.msra.mxu0 0
        %447 = vmatpush.bf16.msra.mxu0 0
        %448 = vmatpush.bf16.msra.mxu0 0
        %449 = vmatpush.bf16.msra.mxu0 0
        %450 = vmatpush.bf16.msra.mxu0 0
        %451 = vmatpush.bf16.msra.mxu0 %v280
        %452 = vmatpush.bf16.msra.mxu0 %v278
        %453 = vmatmul.bf16.gmra.mxu0 %v443
        %v454 = vpop.f32.mrf.mxu0
        %v455 = vadd.f32 %v262, %v454
        %v456 = vpop.f32.mrf.mxu0
        %457 = vdwg.mxu0
        %458 = vmatpush.bf16.msra.mxu0 0
        %459 = vmatpush.bf16.msra.mxu0 0
        %460 = vmatpush.bf16.msra.mxu0 0
        %461 = vmatpush.bf16.msra.mxu0 0
        %462 = vmatpush.bf16.msra.mxu0 0
        %463 = vmatpush.bf16.msra.mxu0 0
        %464 = vmatpush.bf16.msra.mxu0 %v281
        %465 = vmatpush.bf16.msra.mxu0 %v279
        %466 = vmatmul.bf16.gmra.mxu0 %v443
        %v467 = vpop.f32.mrf.mxu0
        %v468 = vadd.f32 %v263, %v467
        %v469 = vpop.f32.mrf.mxu0
        %470 = vdwg.mxu0
        %s471 = scalar_lea.vmem %s214, 24 [#allocation2]
        %v472 = vld [vmem:[%s471] sm:$0xf]
        %v474 = vsel %vm286, %v472, 0
        %476 = vmatpush.bf16.msra.mxu0 0
        %477 = vmatpush.bf16.msra.mxu0 0
        %478 = vmatpush.bf16.msra.mxu0 0
        %479 = vmatpush.bf16.msra.mxu0 0
        %480 = vmatpush.bf16.msra.mxu0 0
        %481 = vmatpush.bf16.msra.mxu0 0
        %482 = vmatpush.bf16.msra.mxu0 %v280
        %483 = vmatpush.bf16.msra.mxu0 %v278
        %484 = vmatmul.bf16.gmra.mxu0 %v474
        %v485 = vpop.f32.mrf.mxu0
        %v486 = vadd.f32 %v262, %v485
        %v487 = vpop.f32.mrf.mxu0
        %488 = vdwg.mxu0
        %489 = vmatpush.bf16.msra.mxu0 0
        %490 = vmatpush.bf16.msra.mxu0 0
        %491 = vmatpush.bf16.msra.mxu0 0
        %492 = vmatpush.bf16.msra.mxu0 0
        %493 = vmatpush.bf16.msra.mxu0 0
        %494 = vmatpush.bf16.msra.mxu0 0
        %495 = vmatpush.bf16.msra.mxu0 %v281
        %496 = vmatpush.bf16.msra.mxu0 %v279
        %497 = vmatmul.bf16.gmra.mxu0 %v474
        %v498 = vpop.f32.mrf.mxu0
        %v499 = vadd.f32 %v263, %v498
        %v500 = vpop.f32.mrf.mxu0
        %501 = vdwg.mxu0
        %s502 = scalar_lea.vmem %s214, 28 [#allocation2]
        %v503 = vld [vmem:[%s502] sm:$0xf]
        %v505 = vsel %vm286, %v503, 0
        %507 = vmatpush.bf16.msra.mxu0 0
        %508 = vmatpush.bf16.msra.mxu0 0
        %509 = vmatpush.bf16.msra.mxu0 0
        %510 = vmatpush.bf16.msra.mxu0 0
        %511 = vmatpush.bf16.msra.mxu0 0
        %512 = vmatpush.bf16.msra.mxu0 0
        %513 = vmatpush.bf16.msra.mxu0 %v280
        %514 = vmatpush.bf16.msra.mxu0 %v278
        %515 = vmatmul.bf16.gmra.mxu0 %v505
        %v516 = vpop.f32.mrf.mxu0
        %v517 = vadd.f32 %v262, %v516
        %v518 = vpop.f32.mrf.mxu0
        %519 = vdwg.mxu0
        %520 = vmatpush.bf16.msra.mxu0 0
        %521 = vmatpush.bf16.msra.mxu0 0
        %522 = vmatpush.bf16.msra.mxu0 0
        %523 = vmatpush.bf16.msra.mxu0 0
        %524 = vmatpush.bf16.msra.mxu0 0
        %525 = vmatpush.bf16.msra.mxu0 0
        %526 = vmatpush.bf16.msra.mxu0 %v281
        %527 = vmatpush.bf16.msra.mxu0 %v279
        %528 = vmatmul.bf16.gmra.mxu0 %v505
        %v529 = vpop.f32.mrf.mxu0
        %v530 = vadd.f32 %v263, %v529
        %v531 = vpop.f32.mrf.mxu0
        %532 = vdwg.mxu0
        %v537 = vunpack.c.l.b16 %v255
        %v538 = vunpack.c.l.b16 %v256
        %v539 = vunpack.c.l.b16 %v257
        %v540 = vunpack.c.l.b16 %v258
        %v541 = vpack.c.b16 %v538, %v537
        %v542 = vpack.c.b16 %v540, %v539
        %v546 = vsel %vm286, 0, 0
        %548 = vmatpush.bf16.msra.mxu0 0
        %549 = vmatpush.bf16.msra.mxu0 0
        %550 = vmatpush.bf16.msra.mxu0 0
        %551 = vmatpush.bf16.msra.mxu0 0
        %552 = vmatpush.bf16.msra.mxu0 0
        %553 = vmatpush.bf16.msra.mxu0 0
        %554 = vmatpush.bf16.msra.mxu0 %v542
        %555 = vmatpush.bf16.msra.mxu0 %v541
        %556 = vmatmul.bf16.gmra.mxu0 %v546
        %v557 = vpop.f32.mrf.mxu0
        %v558 = vadd.f32 0.0, %v557
        %v559 = vpop.f32.mrf.mxu0
        %560 = vdwg.mxu0
        %v561 = vadd.f32 %v300, %v558
        %v562 = vxor.u32 %v561, 2147483648
        %v563 = vmul.f32 %v562, 1.442695
        %v564 = vpow.pop %v563
        %v565 = vadd.f32 %v564, 1.0
        %v566 = vrcp.pop %v565
        %v567 = vmul.f32 %v565, %v566
        %v568 = vsub.f32 1.0, %v567
        %v569 = vmul.f32 %v566, %v568
        %v570 = vadd.f32 %v566, %v569
        %vm571 = vweird.f32 %v565
        %vm572 = vweird.f32 %v566
        %vm573 = vmor %vm571, %vm572
        %v574 = vsel %vm573, %v566, %v570
        %v575 = vand.u32 2147483647, %v565
        %vm576 = vcmp.eq.f32.partialorder %v575, 8.507059e+37
        %v577 = vand.u32 %v565, 2147483648
        %v578 = vor.u32 1.1754944e-38, %v577
        %v579 = vsel %vm576, %v578, %v574
        %v580 = vmul.f32 1.0, %v579
        %v581 = vmul.f32 %v580, 0.0
        %v582 = vpack.c.bf16 %v581, %v581
        %584 = vrot.lane.b32.xlu0 %v582, 64
        %v585 = vpop.permute.xlu0 %584
        %v586 = vunpack.c.h.b16 %v255
        %v587 = vunpack.c.h.b16 %v256
        %v588 = vunpack.c.h.b16 %v257
        %v589 = vunpack.c.h.b16 %v258
        %v590 = vpack.c.b16 %v587, %v586
        %v591 = vpack.c.b16 %v589, %v588
        %v595 = vsel %vm286, %v585, 0
        %597 = vmatpush.bf16.msra.mxu0 0
        %598 = vmatpush.bf16.msra.mxu0 0
        %599 = vmatpush.bf16.msra.mxu0 0
        %600 = vmatpush.bf16.msra.mxu0 0
        %601 = vmatpush.bf16.msra.mxu0 0
        %602 = vmatpush.bf16.msra.mxu0 0
        %603 = vmatpush.bf16.msra.mxu0 %v591
        %604 = vmatpush.bf16.msra.mxu0 %v590
        %605 = vmatmul.bf16.gmra.mxu0 %v595
        %v606 = vpop.f32.mrf.mxu0
        %v607 = vadd.f32 0.0, %v606
        %v608 = vpop.f32.mrf.mxu0
        %609 = vdwg.mxu0
        %v610 = vadd.f32 %v313, %v607
        %v611 = vtanh.pop %v610
        %v612 = vmul.f32 %v580, %v611
        %614 = vrot.lane.b32.xlu0 %v581, 32
        %v615 = vpop.permute.xlu0 %614
        %v617 = vadd.f32 %v612, %v615
        %v618 = vtanh.pop %v617
        %620 = vrot.lane.b32.xlu0 %v618, 32
        %v621 = vpop.permute.xlu0 %620
        %v623 = vmul.f32 %v580, %v621
        %v624 = vpack.c.bf16 %v623, %v623
        %626 = vrot.lane.b32.xlu0 %v624, 96
        %v627 = vpop.permute.xlu0 %626
        %v629 = vsel %vm286, %v627, 0
        %631 = vmatpush.bf16.msra.mxu0 0
        %632 = vmatpush.bf16.msra.mxu0 0
        %633 = vmatpush.bf16.msra.mxu0 0
        %634 = vmatpush.bf16.msra.mxu0 0
        %635 = vmatpush.bf16.msra.mxu0 0
        %636 = vmatpush.bf16.msra.mxu0 0
        %637 = vmatpush.bf16.msra.mxu0 %v542
        %638 = vmatpush.bf16.msra.mxu0 %v541
        %639 = vmatmul.bf16.gmra.mxu0 %v629
        %v640 = vpop.f32.mrf.mxu0
        %v641 = vadd.f32 0.0, %v640
        %v642 = vpop.f32.mrf.mxu0
        %643 = vdwg.mxu0
        %v644 = vadd.f32 %v331, %v641
        %v645 = vxor.u32 %v644, 2147483648
        %v646 = vmul.f32 %v645, 1.442695
        %v647 = vpow.pop %v646
        %v648 = vadd.f32 %v647, 1.0
        %v649 = vrcp.pop %v648
        %v650 = vmul.f32 %v648, %v649
        %v651 = vsub.f32 1.0, %v650
        %v652 = vmul.f32 %v649, %v651
        %v653 = vadd.f32 %v649, %v652
        %vm654 = vweird.f32 %v648
        %vm655 = vweird.f32 %v649
        %vm656 = vmor %vm654, %vm655
        %v657 = vsel %vm656, %v649, %v653
        %v658 = vand.u32 2147483647, %v648
        %vm659 = vcmp.eq.f32.partialorder %v658, 8.507059e+37
        %v660 = vand.u32 %v648, 2147483648
        %v661 = vor.u32 1.1754944e-38, %v660
        %v662 = vsel %vm659, %v661, %v657
        %v663 = vmul.f32 1.0, %v662
        %664 = vrot.lane.b32.xlu0 %v618, 64
        %v665 = vpop.permute.xlu0 %664
        %v667 = vmul.f32 %v663, %v665
        %v668 = vpack.c.bf16 %v667, %v667
        %670 = vrot.lane.b32.xlu0 %v668, 64
        %v671 = vpop.permute.xlu0 %670
        %v673 = vsel %vm286, %v671, 0
        %675 = vmatpush.bf16.msra.mxu0 0
        %676 = vmatpush.bf16.msra.mxu0 0
        %677 = vmatpush.bf16.msra.mxu0 0
        %678 = vmatpush.bf16.msra.mxu0 0
        %679 = vmatpush.bf16.msra.mxu0 0
        %680 = vmatpush.bf16.msra.mxu0 0
        %681 = vmatpush.bf16.msra.mxu0 %v591
        %682 = vmatpush.bf16.msra.mxu0 %v590
        %683 = vmatmul.bf16.gmra.mxu0 %v673
        %v684 = vpop.f32.mrf.mxu0
        %v685 = vadd.f32 0.0, %v684
        %v686 = vpop.f32.mrf.mxu0
        %687 = vdwg.mxu0
        %v688 = vadd.f32 %v344, %v685
        %v689 = vtanh.pop %v688
        %v690 = vmul.f32 %v663, %v689
        %692 = vrot.lane.b32.xlu0 %v617, 96
        %v693 = vpop.permute.xlu0 %692
        %v695 = vmul.f32 %v663, %v693
        %697 = vrot.lane.b32.xlu0 %v695, 32
        %v698 = vpop.permute.xlu0 %697
        %v700 = vadd.f32 %v690, %v698
        %v701 = vtanh.pop %v700
        %703 = vrot.lane.b32.xlu0 %v701, 32
        %v704 = vpop.permute.xlu0 %703
        %v706 = vmul.f32 %v663, %v704
        %v707 = vpack.c.bf16 %v706, %v706
        %709 = vrot.lane.b32.xlu0 %v707, 96
        %v710 = vpop.permute.xlu0 %709
        %v712 = vsel %vm286, %v710, 0
        %714 = vmatpush.bf16.msra.mxu0 0
        %715 = vmatpush.bf16.msra.mxu0 0
        %716 = vmatpush.bf16.msra.mxu0 0
        %717 = vmatpush.bf16.msra.mxu0 0
        %718 = vmatpush.bf16.msra.mxu0 0
        %719 = vmatpush.bf16.msra.mxu0 0
        %720 = vmatpush.bf16.msra.mxu0 %v542
        %721 = vmatpush.bf16.msra.mxu0 %v541
        %722 = vmatmul.bf16.gmra.mxu0 %v712
        %v723 = vpop.f32.mrf.mxu0
        %v724 = vadd.f32 0.0, %v723
        %v725 = vpop.f32.mrf.mxu0
        %726 = vdwg.mxu0
        %v727 = vadd.f32 %v362, %v724
        %v728 = vxor.u32 %v727, 2147483648
        %v729 = vmul.f32 %v728, 1.442695
        %v730 = vpow.pop %v729
        %v731 = vadd.f32 %v730, 1.0
        %v732 = vrcp.pop %v731
        %v733 = vmul.f32 %v731, %v732
        %v734 = vsub.f32 1.0, %v733
        %v735 = vmul.f32 %v732, %v734
        %v736 = vadd.f32 %v732, %v735
        %vm737 = vweird.f32 %v731
        %vm738 = vweird.f32 %v732
        %vm739 = vmor %vm737, %vm738
        %v740 = vsel %vm739, %v732, %v736
        %v741 = vand.u32 2147483647, %v731
        %vm742 = vcmp.eq.f32.partialorder %v741, 8.507059e+37
        %v743 = vand.u32 %v731, 2147483648
        %v744 = vor.u32 1.1754944e-38, %v743
        %v745 = vsel %vm742, %v744, %v740
        %v746 = vmul.f32 1.0, %v745
        %747 = vrot.lane.b32.xlu0 %v701, 64
        %v748 = vpop.permute.xlu0 %747
        %v750 = vmul.f32 %v746, %v748
        %v751 = vpack.c.bf16 %v750, %v750
        %753 = vrot.lane.b32.xlu0 %v751, 64
        %v754 = vpop.permute.xlu0 %753
        %v756 = vsel %vm286, %v754, 0
        %758 = vmatpush.bf16.msra.mxu0 0
        %759 = vmatpush.bf16.msra.mxu0 0
        %760 = vmatpush.bf16.msra.mxu0 0
        %761 = vmatpush.bf16.msra.mxu0 0
        %762 = vmatpush.bf16.msra.mxu0 0
        %763 = vmatpush.bf16.msra.mxu0 0
        %764 = vmatpush.bf16.msra.mxu0 %v591
        %765 = vmatpush.bf16.msra.mxu0 %v590
        %766 = vmatmul.bf16.gmra.mxu0 %v756
        %v767 = vpop.f32.mrf.mxu0
        %v768 = vadd.f32 0.0, %v767
        %v769 = vpop.f32.mrf.mxu0
        %770 = vdwg.mxu0
        %v771 = vadd.f32 %v375, %v768
        %v772 = vtanh.pop %v771
        %v773 = vmul.f32 %v746, %v772
        %775 = vrot.lane.b32.xlu0 %v700, 96
        %v776 = vpop.permute.xlu0 %775
        %v778 = vmul.f32 %v746, %v776
        %780 = vrot.lane.b32.xlu0 %v778, 32
        %v781 = vpop.permute.xlu0 %780
        %v783 = vadd.f32 %v773, %v781
        %v784 = vtanh.pop %v783
        %786 = vrot.lane.b32.xlu0 %v784, 32
        %v787 = vpop.permute.xlu0 %786
        %v789 = vmul.f32 %v746, %v787
        %v790 = vpack.c.bf16 %v789, %v789
        %792 = vrot.lane.b32.xlu0 %v790, 96
        %v793 = vpop.permute.xlu0 %792
        %v795 = vsel %vm286, %v793, 0
        %797 = vmatpush.bf16.msra.mxu0 0
        %798 = vmatpush.bf16.msra.mxu0 0
        %799 = vmatpush.bf16.msra.mxu0 0
        %800 = vmatpush.bf16.msra.mxu0 0
        %801 = vmatpush.bf16.msra.mxu0 0
        %802 = vmatpush.bf16.msra.mxu0 0
        %803 = vmatpush.bf16.msra.mxu0 %v542
        %804 = vmatpush.bf16.msra.mxu0 %v541
        %805 = vmatmul.bf16.gmra.mxu0 %v795
        %v806 = vpop.f32.mrf.mxu0
        %v807 = vadd.f32 0.0, %v806
        %v808 = vpop.f32.mrf.mxu0
        %809 = vdwg.mxu0
        %v810 = vadd.f32 %v393, %v807
        %v811 = vxor.u32 %v810, 2147483648
        %v812 = vmul.f32 %v811, 1.442695
        %v813 = vpow.pop %v812
        %v814 = vadd.f32 %v813, 1.0
        %v815 = vrcp.pop %v814
        %v816 = vmul.f32 %v814, %v815
        %v817 = vsub.f32 1.0, %v816
        %v818 = vmul.f32 %v815, %v817
        %v819 = vadd.f32 %v815, %v818
        %vm820 = vweird.f32 %v814
        %vm821 = vweird.f32 %v815
        %vm822 = vmor %vm820, %vm821
        %v823 = vsel %vm822, %v815, %v819
        %v824 = vand.u32 2147483647, %v814
        %vm825 = vcmp.eq.f32.partialorder %v824, 8.507059e+37
        %v826 = vand.u32 %v814, 2147483648
        %v827 = vor.u32 1.1754944e-38, %v826
        %v828 = vsel %vm825, %v827, %v823
        %v829 = vmul.f32 1.0, %v828
        %830 = vrot.lane.b32.xlu0 %v784, 64
        %v831 = vpop.permute.xlu0 %830
        %v833 = vmul.f32 %v829, %v831
        %v834 = vpack.c.bf16 %v833, %v833
        %836 = vrot.lane.b32.xlu0 %v834, 64
        %v837 = vpop.permute.xlu0 %836
        %v839 = vsel %vm286, %v837, 0
        %841 = vmatpush.bf16.msra.mxu0 0
        %842 = vmatpush.bf16.msra.mxu0 0
        %843 = vmatpush.bf16.msra.mxu0 0
        %844 = vmatpush.bf16.msra.mxu0 0
        %845 = vmatpush.bf16.msra.mxu0 0
        %846 = vmatpush.bf16.msra.mxu0 0
        %847 = vmatpush.bf16.msra.mxu0 %v591
        %848 = vmatpush.bf16.msra.mxu0 %v590
        %849 = vmatmul.bf16.gmra.mxu0 %v839
        %v850 = vpop.f32.mrf.mxu0
        %v851 = vadd.f32 0.0, %v850
        %v852 = vpop.f32.mrf.mxu0
        %853 = vdwg.mxu0
        %v854 = vadd.f32 %v406, %v851
        %v855 = vtanh.pop %v854
        %v856 = vmul.f32 %v829, %v855
        %858 = vrot.lane.b32.xlu0 %v783, 96
        %v859 = vpop.permute.xlu0 %858
        %v861 = vmul.f32 %v829, %v859
        %863 = vrot.lane.b32.xlu0 %v861, 32
        %v864 = vpop.permute.xlu0 %863
        %v866 = vadd.f32 %v856, %v864
        %v867 = vtanh.pop %v866
        %869 = vrot.lane.b32.xlu0 %v867, 32
        %v870 = vpop.permute.xlu0 %869
        %v872 = vmul.f32 %v829, %v870
        %v873 = vpack.c.bf16 %v872, %v872
        %875 = vrot.lane.b32.xlu0 %v873, 96
        %v876 = vpop.permute.xlu0 %875
        %v878 = vsel %vm286, %v876, 0
        %880 = vmatpush.bf16.msra.mxu0 0
        %881 = vmatpush.bf16.msra.mxu0 0
        %882 = vmatpush.bf16.msra.mxu0 0
        %883 = vmatpush.bf16.msra.mxu0 0
        %884 = vmatpush.bf16.msra.mxu0 0
        %885 = vmatpush.bf16.msra.mxu0 0
        %886 = vmatpush.bf16.msra.mxu0 %v542
        %887 = vmatpush.bf16.msra.mxu0 %v541
        %888 = vmatmul.bf16.gmra.mxu0 %v878
        %v889 = vpop.f32.mrf.mxu0
        %v890 = vadd.f32 0.0, %v889
        %v891 = vpop.f32.mrf.mxu0
        %892 = vdwg.mxu0
        %v893 = vadd.f32 %v424, %v890
        %v894 = vxor.u32 %v893, 2147483648
        %v895 = vmul.f32 %v894, 1.442695
        %v896 = vpow.pop %v895
        %v897 = vadd.f32 %v896, 1.0
        %v898 = vrcp.pop %v897
        %v899 = vmul.f32 %v897, %v898
        %v900 = vsub.f32 1.0, %v899
        %v901 = vmul.f32 %v898, %v900
        %v902 = vadd.f32 %v898, %v901
        %vm903 = vweird.f32 %v897
        %vm904 = vweird.f32 %v898
        %vm905 = vmor %vm903, %vm904
        %v906 = vsel %vm905, %v898, %v902
        %v907 = vand.u32 2147483647, %v897
        %vm908 = vcmp.eq.f32.partialorder %v907, 8.507059e+37
        %v909 = vand.u32 %v897, 2147483648
        %v910 = vor.u32 1.1754944e-38, %v909
        %v911 = vsel %vm908, %v910, %v906
        %v912 = vmul.f32 1.0, %v911
        %913 = vrot.lane.b32.xlu0 %v867, 64
        %v914 = vpop.permute.xlu0 %913
        %v916 = vmul.f32 %v912, %v914
        %v917 = vpack.c.bf16 %v916, %v916
        %919 = vrot.lane.b32.xlu0 %v917, 64
        %v920 = vpop.permute.xlu0 %919
        %v922 = vsel %vm286, %v920, 0
        %924 = vmatpush.bf16.msra.mxu0 0
        %925 = vmatpush.bf16.msra.mxu0 0
        %926 = vmatpush.bf16.msra.mxu0 0
        %927 = vmatpush.bf16.msra.mxu0 0
        %928 = vmatpush.bf16.msra.mxu0 0
        %929 = vmatpush.bf16.msra.mxu0 0
        %930 = vmatpush.bf16.msra.mxu0 %v591
        %931 = vmatpush.bf16.msra.mxu0 %v590
        %932 = vmatmul.bf16.gmra.mxu0 %v922
        %v933 = vpop.f32.mrf.mxu0
        %v934 = vadd.f32 0.0, %v933
        %v935 = vpop.f32.mrf.mxu0
        %936 = vdwg.mxu0
        %v937 = vadd.f32 %v437, %v934
        %v938 = vtanh.pop %v937
        %v939 = vmul.f32 %v912, %v938
        %941 = vrot.lane.b32.xlu0 %v866, 96
        %v942 = vpop.permute.xlu0 %941
        %v944 = vmul.f32 %v912, %v942
        %946 = vrot.lane.b32.xlu0 %v944, 32
        %v947 = vpop.permute.xlu0 %946
        %v949 = vadd.f32 %v939, %v947
        %v950 = vtanh.pop %v949
        %952 = vrot.lane.b32.xlu0 %v950, 32
        %v953 = vpop.permute.xlu0 %952
        %v955 = vmul.f32 %v912, %v953
        %v956 = vpack.c.bf16 %v955, %v955
        %958 = vrot.lane.b32.xlu0 %v956, 96
        %v959 = vpop.permute.xlu0 %958
        %v961 = vsel %vm286, %v959, 0
        %963 = vmatpush.bf16.msra.mxu0 0
        %964 = vmatpush.bf16.msra.mxu0 0
        %965 = vmatpush.bf16.msra.mxu0 0
        %966 = vmatpush.bf16.msra.mxu0 0
        %967 = vmatpush.bf16.msra.mxu0 0
        %968 = vmatpush.bf16.msra.mxu0 0
        %969 = vmatpush.bf16.msra.mxu0 %v542
        %970 = vmatpush.bf16.msra.mxu0 %v541
        %971 = vmatmul.bf16.gmra.mxu0 %v961
        %v972 = vpop.f32.mrf.mxu0
        %v973 = vadd.f32 0.0, %v972
        %v974 = vpop.f32.mrf.mxu0
        %975 = vdwg.mxu0
        %v976 = vadd.f32 %v455, %v973
        %v977 = vxor.u32 %v976, 2147483648
        %v978 = vmul.f32 %v977, 1.442695
        %v979 = vpow.pop %v978
        %v980 = vadd.f32 %v979, 1.0
        %v981 = vrcp.pop %v980
        %v982 = vmul.f32 %v980, %v981
        %v983 = vsub.f32 1.0, %v982
        %v984 = vmul.f32 %v981, %v983
        %v985 = vadd.f32 %v981, %v984
        %vm986 = vweird.f32 %v980
        %vm987 = vweird.f32 %v981
        %vm988 = vmor %vm986, %vm987
        %v989 = vsel %vm988, %v981, %v985
        %v990 = vand.u32 2147483647, %v980
        %vm991 = vcmp.eq.f32.partialorder %v990, 8.507059e+37
        %v992 = vand.u32 %v980, 2147483648
        %v993 = vor.u32 1.1754944e-38, %v992
        %v994 = vsel %vm991, %v993, %v989
        %v995 = vmul.f32 1.0, %v994
        %996 = vrot.lane.b32.xlu0 %v950, 64
        %v997 = vpop.permute.xlu0 %996
        %v999 = vmul.f32 %v995, %v997
        %v1000 = vpack.c.bf16 %v999, %v999
        %1002 = vrot.lane.b32.xlu0 %v1000, 64
        %v1003 = vpop.permute.xlu0 %1002
        %v1005 = vsel %vm286, %v1003, 0
        %1007 = vmatpush.bf16.msra.mxu0 0
        %1008 = vmatpush.bf16.msra.mxu0 0
        %1009 = vmatpush.bf16.msra.mxu0 0
        %1010 = vmatpush.bf16.msra.mxu0 0
        %1011 = vmatpush.bf16.msra.mxu0 0
        %1012 = vmatpush.bf16.msra.mxu0 0
        %1013 = vmatpush.bf16.msra.mxu0 %v591
        %1014 = vmatpush.bf16.msra.mxu0 %v590
        %1015 = vmatmul.bf16.gmra.mxu0 %v1005
        %v1016 = vpop.f32.mrf.mxu0
        %v1017 = vadd.f32 0.0, %v1016
        %v1018 = vpop.f32.mrf.mxu0
        %1019 = vdwg.mxu0
        %v1020 = vadd.f32 %v468, %v1017
        %v1021 = vtanh.pop %v1020
        %v1022 = vmul.f32 %v995, %v1021
        %1024 = vrot.lane.b32.xlu0 %v949, 96
        %v1025 = vpop.permute.xlu0 %1024
        %v1027 = vmul.f32 %v995, %v1025
        %1029 = vrot.lane.b32.xlu0 %v1027, 32
        %v1030 = vpop.permute.xlu0 %1029
        %v1032 = vadd.f32 %v1022, %v1030
        %v1033 = vtanh.pop %v1032
        %1035 = vrot.lane.b32.xlu0 %v1033, 32
        %v1036 = vpop.permute.xlu0 %1035
        %v1038 = vmul.f32 %v995, %v1036
        %v1039 = vpack.c.bf16 %v1038, %v1038
        %1041 = vrot.lane.b32.xlu0 %v1039, 96
        %v1042 = vpop.permute.xlu0 %1041
        %v1044 = vsel %vm286, %v1042, 0
        %1046 = vmatpush.bf16.msra.mxu0 0
        %1047 = vmatpush.bf16.msra.mxu0 0
        %1048 = vmatpush.bf16.msra.mxu0 0
        %1049 = vmatpush.bf16.msra.mxu0 0
        %1050 = vmatpush.bf16.msra.mxu0 0
        %1051 = vmatpush.bf16.msra.mxu0 0
        %1052 = vmatpush.bf16.msra.mxu0 %v542
        %1053 = vmatpush.bf16.msra.mxu0 %v541
        %1054 = vmatmul.bf16.gmra.mxu0 %v1044
        %v1055 = vpop.f32.mrf.mxu0
        %v1056 = vadd.f32 0.0, %v1055
        %v1057 = vpop.f32.mrf.mxu0
        %1058 = vdwg.mxu0
        %v1059 = vadd.f32 %v486, %v1056
        %v1060 = vxor.u32 %v1059, 2147483648
        %v1061 = vmul.f32 %v1060, 1.442695
        %v1062 = vpow.pop %v1061
        %v1063 = vadd.f32 %v1062, 1.0
        %v1064 = vrcp.pop %v1063
        %v1065 = vmul.f32 %v1063, %v1064
        %v1066 = vsub.f32 1.0, %v1065
        %v1067 = vmul.f32 %v1064, %v1066
        %v1068 = vadd.f32 %v1064, %v1067
        %vm1069 = vweird.f32 %v1063
        %vm1070 = vweird.f32 %v1064
        %vm1071 = vmor %vm1069, %vm1070
        %v1072 = vsel %vm1071, %v1064, %v1068
        %v1073 = vand.u32 2147483647, %v1063
        %vm1074 = vcmp.eq.f32.partialorder %v1073, 8.507059e+37
        %v1075 = vand.u32 %v1063, 2147483648
        %v1076 = vor.u32 1.1754944e-38, %v1075
        %v1077 = vsel %vm1074, %v1076, %v1072
        %v1078 = vmul.f32 1.0, %v1077
        %1079 = vrot.lane.b32.xlu0 %v1033, 64
        %v1080 = vpop.permute.xlu0 %1079
        %v1082 = vmul.f32 %v1078, %v1080
        %v1083 = vpack.c.bf16 %v1082, %v1082
        %1085 = vrot.lane.b32.xlu0 %v1083, 64
        %v1086 = vpop.permute.xlu0 %1085
        %v1088 = vsel %vm286, %v1086, 0
        %1090 = vmatpush.bf16.msra.mxu0 0
        %1091 = vmatpush.bf16.msra.mxu0 0
        %1092 = vmatpush.bf16.msra.mxu0 0
        %1093 = vmatpush.bf16.msra.mxu0 0
        %1094 = vmatpush.bf16.msra.mxu0 0
        %1095 = vmatpush.bf16.msra.mxu0 0
        %1096 = vmatpush.bf16.msra.mxu0 %v591
        %1097 = vmatpush.bf16.msra.mxu0 %v590
        %1098 = vmatmul.bf16.gmra.mxu0 %v1088
        %v1099 = vpop.f32.mrf.mxu0
        %v1100 = vadd.f32 0.0, %v1099
        %v1101 = vpop.f32.mrf.mxu0
        %1102 = vdwg.mxu0
        %v1103 = vadd.f32 %v499, %v1100
        %v1104 = vtanh.pop %v1103
        %v1105 = vmul.f32 %v1078, %v1104
        %1107 = vrot.lane.b32.xlu0 %v1032, 96
        %v1108 = vpop.permute.xlu0 %1107
        %v1110 = vmul.f32 %v1078, %v1108
        %1112 = vrot.lane.b32.xlu0 %v1110, 32
        %v1113 = vpop.permute.xlu0 %1112
        %v1115 = vadd.f32 %v1105, %v1113
        %v1116 = vtanh.pop %v1115
        %1118 = vrot.lane.b32.xlu0 %v1116, 32
        %v1119 = vpop.permute.xlu0 %1118
        %v1121 = vmul.f32 %v1078, %v1119
        %v1122 = vpack.c.bf16 %v1121, %v1121
        %1124 = vrot.lane.b32.xlu0 %v1122, 96
        %v1125 = vpop.permute.xlu0 %1124
        %v1127 = vsel %vm286, %v1125, 0
        %1129 = vmatpush.bf16.msra.mxu0 0
        %1130 = vmatpush.bf16.msra.mxu0 0
        %1131 = vmatpush.bf16.msra.mxu0 0
        %1132 = vmatpush.bf16.msra.mxu0 0
        %1133 = vmatpush.bf16.msra.mxu0 0
        %1134 = vmatpush.bf16.msra.mxu0 0
        %1135 = vmatpush.bf16.msra.mxu0 %v542
        %1136 = vmatpush.bf16.msra.mxu0 %v541
        %1137 = vmatmul.bf16.gmra.mxu0 %v1127
        %v1138 = vpop.f32.mrf.mxu0
        %v1139 = vadd.f32 0.0, %v1138
        %v1140 = vpop.f32.mrf.mxu0
        %1141 = vdwg.mxu0
        %v1142 = vadd.f32 %v517, %v1139
        %v1143 = vxor.u32 %v1142, 2147483648
        %v1144 = vmul.f32 %v1143, 1.442695
        %v1145 = vpow.pop %v1144
        %v1146 = vadd.f32 %v1145, 1.0
        %v1147 = vrcp.pop %v1146
        %v1148 = vmul.f32 %v1146, %v1147
        %v1149 = vsub.f32 1.0, %v1148
        %v1150 = vmul.f32 %v1147, %v1149
        %v1151 = vadd.f32 %v1147, %v1150
        %vm1152 = vweird.f32 %v1146
        %vm1153 = vweird.f32 %v1147
        %vm1154 = vmor %vm1152, %vm1153
        %v1155 = vsel %vm1154, %v1147, %v1151
        %v1156 = vand.u32 2147483647, %v1146
        %vm1157 = vcmp.eq.f32.partialorder %v1156, 8.507059e+37
        %v1158 = vand.u32 %v1146, 2147483648
        %v1159 = vor.u32 1.1754944e-38, %v1158
        %v1160 = vsel %vm1157, %v1159, %v1155
        %v1161 = vmul.f32 1.0, %v1160
        %1162 = vrot.lane.b32.xlu0 %v1116, 64
        %v1163 = vpop.permute.xlu0 %1162
        %v1165 = vmul.f32 %v1161, %v1163
        %v1166 = vpack.c.bf16 %v1165, %v1165
        %1168 = vrot.lane.b32.xlu0 %v1166, 64
        %v1169 = vpop.permute.xlu0 %1168
        %v1171 = vsel %vm286, %v1169, 0
        %1173 = vmatpush.bf16.msra.mxu0 0
        %1174 = vmatpush.bf16.msra.mxu0 0
        %1175 = vmatpush.bf16.msra.mxu0 0
        %1176 = vmatpush.bf16.msra.mxu0 0
        %1177 = vmatpush.bf16.msra.mxu0 0
        %1178 = vmatpush.bf16.msra.mxu0 0
        %1179 = vmatpush.bf16.msra.mxu0 %v591
        %1180 = vmatpush.bf16.msra.mxu0 %v590
        %1181 = vmatmul.bf16.gmra.mxu0 %v1171
        %v1182 = vpop.f32.mrf.mxu0
        %v1183 = vadd.f32 0.0, %v1182
        %v1184 = vpop.f32.mrf.mxu0
        %1185 = vdwg.mxu0
        %v1186 = vadd.f32 %v530, %v1183
        %v1187 = vtanh.pop %v1186
        %v1188 = vmul.f32 %v1161, %v1187
        %1190 = vrot.lane.b32.xlu0 %v1115, 96
        %v1191 = vpop.permute.xlu0 %1190
        %v1193 = vmul.f32 %v1161, %v1191
        %1195 = vrot.lane.b32.xlu0 %v1193, 32
        %v1196 = vpop.permute.xlu0 %1195
        %v1198 = vadd.f32 %v1188, %v1196
        %v1199 = vtanh.pop %v1198
        %1201 = vrot.lane.b32.xlu0 %v1199, 32
        %v1202 = vpop.permute.xlu0 %1201
        %v1204 = vmul.f32 %v1161, %v1202
        %1205 = vst.msk [vmem:[%s249] sm:$0xff] %vm286, %v1198
        %1207 = vrot.lane.b32.xlu0 %v1204, 96
        %v1208 = vpop.permute.xlu0 %1207
        %s1210 = scalar_lea.vmem %s249, 8 [#allocation8]
        %1211 = vst.msk [vmem:[%s1210] sm:$0xff] %vm286, %v1208
        %s1212 = sand.u32 %s119, 1
        %s1213 = scalar_lea.sflag [#allocation4], %s1212
        %s1214 = sand.u32 %s119, 1
        %s1215 = smul.addr %s1214, 16
        %s1216 = scalar_lea.vmem [#allocation8], %s1215
        // Predicated region
        $region49: #{tpu_custom_call.1} parent=35 // pred_check
          %p1217 = pneg %p129
        $region50: #{tpu_custom_call.1} parent=35 // pred_check_branch
          %1219 = sbr.rel (%p1217) target = $region52
        $region51: #{tpu_custom_call.1} parent=35 // pred_region
          %1221 = vsyncadd %s1213, 0
          %s1222 = smul.addr %s22, 8
          %s1223 = scalar_lea.hbm %s4, %s1222
          %s1224 = sshll.u32 %s1216, 4
          %s1225 = int_to_ptr.vmem [resolvable:$true] %s1224
          %s1226 = sshll.u32 %s1223, 4
          %s1227 = int_to_ptr.hbm [resolvable:$true] %s1226
          %1232 = dma.vmem_to_hbm [thread:$0]  %s1225, 256, %s1227, %s1213, 128, 256, 8
        $region52: #{tpu_custom_call.1} parent=35 // pred_fallthru
          _
      $region36: #{tpu_custom_call.1} parent=5 // pred_fallthru
        _
      %p1233 = scmp.le.s32.totalorder 2, %s17
      // Predicated region
      $region53: #{tpu_custom_call.1} parent=5 // pred_check
        %p1234 = pneg %p1233
      $region54: #{tpu_custom_call.1} parent=5 // pred_check_branch
        %1236 = sbr.rel (%p1234) target = $region56
      $region55: #{tpu_custom_call.1} parent=5 // pred_region
        %s1237 = ssub.s32 %s17, 2
        // Predicated region
        $region57: #{tpu_custom_call.1} parent=55 // pred_check
          %p1238 = pneg %p135
        $region58: #{tpu_custom_call.1} parent=55 // pred_check_branch
          %1240 = sbr.rel (%p1238) target = $region60
        $region59: #{tpu_custom_call.1} parent=55 // pred_region
          %s1241 = sand.u32 %s120, 1
          %s1242 = scalar_lea.sflag [#allocation4], %s1241
          %s1243 = sand.u32 %s120, 1
          %s1244 = smul.addr %s1243, 16
          %s1245 = scalar_lea.vmem [#allocation8], %s1244
          %1247 = dma.done %s1242, 256
        $region60: #{tpu_custom_call.1} parent=55 // pred_fallthru
          _
      $region56: #{tpu_custom_call.1} parent=5 // pred_fallthru
        _
    $region6: #{tpu_custom_call.1} parent=1 // loop_footer
      %s21 = sadd.s32 1, %s17
    $region7: #{tpu_custom_call.1} parent=1 // loop_footer_branch
      %16 = sbr.rel target = $region3
    $region8: #{tpu_custom_call.1} parent=1 // loop_exit
      _
    %1248 = vsyncpa [#allocation3], 1
    %s1249 = scalar_lea.sflag [#allocation3], 1
    %1250 = vsyncpa %s1249, 1
    %1251 = vsyncpa [#allocation6], 1
    %1252 = vsyncpa [#allocation4], 1
    %s1253 = scalar_lea.sflag [#allocation4], 1
    %1254 = vsyncpa %s1253, 1

</llo_original>
